<compile_context>
chip_gen: v6e
topology: v6e:2x2x1
jax: 0.10.0
libtpu: 0.0.40
codegen_flags: <defaults>
</compile_context>

<pallas_src>
import jax
import jax.numpy as jnp
from jax.experimental import pallas as pl
from jax.experimental.pallas import tpu as pltpu


def _round_up(n, m):
    return ((n + m - 1) // m) * m


def _mlp_kernel(x_ref, w1_ref, b1_ref, w2_ref, b2_ref, w3_ref, b3_ref, o_ref):
    # linear1 + folded actnorm1 -> relu   (bf16 operands, f32 accumulate)
    h = jnp.dot(x_ref[...], w1_ref[...], preferred_element_type=jnp.float32)
    h = jnp.maximum(h + b1_ref[...], 0.0)
    # linear2 + folded actnorm2 -> relu
    h = jnp.dot(h.astype(jnp.bfloat16), w2_ref[...],
                preferred_element_type=jnp.float32)
    h = jnp.maximum(h + b2_ref[...], 0.0)
    # linear3
    out = jnp.dot(h.astype(jnp.bfloat16), w3_ref[...],
                  preferred_element_type=jnp.float32) + b3_ref[...]
    o_ref[...] = out.astype(o_ref.dtype)


def mlp_forward(x, params, *, tm=512):
    """x: (..., dim). Returns the MLP output (..., dim_out) in float32,
    matching the PyTorch MLP module (ActNorm z-output only; logdet unused)."""
    lead_shape = x.shape[:-1]
    dim = x.shape[-1]
    x2 = x.reshape(-1, dim)
    M = x2.shape[0]

    width = params["w1"].shape[0]
    dim_out = params["w3"].shape[0]
    w_pad = _round_up(width, 128)
    dout_pad = _round_up(dim_out, 128)

    # ---- fold ActNorm into the linears (one-time (width,)-sized ops):
    #      w' = W^T * diag(exp(-scale)),  b' = (b - bias) * exp(-scale) -------
    s1 = jnp.exp(-params["an1_scale"].astype(jnp.float32))
    w1 = params["w1"].astype(jnp.float32).T * s1[None, :]            # (dim, width)
    b1 = (params["b1"] - params["an1_bias"]).astype(jnp.float32) * s1
    s2 = jnp.exp(-params["an2_scale"].astype(jnp.float32))
    w2 = params["w2"].astype(jnp.float32).T * s2[None, :]            # (width, width)
    b2 = (params["b2"] - params["an2_bias"]).astype(jnp.float32) * s2
    w3 = params["w3"].astype(jnp.float32).T                          # (width, dim_out)
    b3 = params["b3"].astype(jnp.float32)

    def pad_to(a, shape):
        pads = [(0, t - s) for s, t in zip(a.shape, shape)]
        return jnp.pad(a, pads) if any(p for _, p in pads) else a

    # lane-pad to x128, then cast weights to bf16 (biases stay f32)
    w1 = pad_to(w1, (dim, w_pad)).astype(jnp.bfloat16)
    w2 = pad_to(w2, (w_pad, w_pad)).astype(jnp.bfloat16)
    w3 = pad_to(w3, (w_pad, dout_pad)).astype(jnp.bfloat16)
    b1 = pad_to(b1, (w_pad,)).reshape(1, w_pad)
    b2 = pad_to(b2, (w_pad,)).reshape(1, w_pad)
    b3 = pad_to(b3, (dout_pad,)).reshape(1, dout_pad)

    # bf16 streamed activations (halved DMA bytes; in production the upstream
    # producer would already emit bf16, so this cast fuses away).
    x2 = x2.astype(jnp.bfloat16)

    # ---- row tiling over M; ragged last block handled/masked by Pallas -----
    TM = _round_up(min(tm, _round_up(M, 8)), 8)
    if pl.cdiv(M, TM) < 2 and M > 8:      # >=2 steps -> 2-TC sharding on v7x
        TM = _round_up(pl.cdiv(M, 2), 8)
    grid = (pl.cdiv(M, TM),)

    weight_elems = dim * w_pad + w_pad * w_pad + w_pad * dout_pad
    bias_elems = 2 * w_pad + dout_pad
    vmem_need = (2 * TM * dim * 2            # x tile (bf16, double-buffered)
                 + 2 * TM * dout_pad * 4     # out tile (f32, double-buffered)
                 + weight_elems * 2          # bf16 weights (single-buffered)
                 + bias_elems * 4            # f32 biases
                 + 3 * TM * w_pad * 4)       # intermediates (upper bound)
    # TODO(synk): for width >~ 3-4K, add a column-tiled grid axis for w2/w3
    # instead of keeping all weights VMEM-resident (v7x 64 MiB ceiling).
    vmem_limit = int(min(max(2 * vmem_need, 32 * 1024 * 1024),
                         64 * 1024 * 1024))

    cost = pl.CostEstimate(
        flops=2 * M * weight_elems,
        transcendentals=0,
        bytes_accessed=(M * dim * 2 + M * dout_pad * 4
                        + weight_elems * 2 + bias_elems * 4))

    x_spec = pl.BlockSpec((TM, dim), lambda i: (i, 0))     # streamed rows
    out_spec = pl.BlockSpec((TM, dout_pad), lambda i: (i, 0))
    weight_shapes = [(dim, w_pad), (1, w_pad), (w_pad, w_pad), (1, w_pad),
                     (w_pad, dout_pad), (1, dout_pad)]

    def run(single_buffer_weights):
        def const_spec(shape):
            nd = len(shape)
            if single_buffer_weights:
                return pl.BlockSpec(shape, lambda i, nd=nd: (0,) * nd,
                                    pipeline_mode=pl.Buffered(1))
            return pl.BlockSpec(shape, lambda i, nd=nd: (0,) * nd)

        return pl.pallas_call(
            _mlp_kernel,
            grid=grid,
            in_specs=[x_spec] + [const_spec(s) for s in weight_shapes],
            out_specs=out_spec,
            out_shape=jax.ShapeDtypeStruct((M, dout_pad), jnp.float32),
            compiler_params=pltpu.CompilerParams(
                dimension_semantics=("parallel",),
                vmem_limit_bytes=vmem_limit),
            cost_estimate=cost,
        )(x2, w1, b1, w2, b2, w3, b3)

    try:
        out = run(single_buffer_weights=True)
    except Exception:
        # Fallback for jax builds where pipeline_mode=pl.Buffered(1) is not
        # honored by the top-level pallas_call lowering.
        out = run(single_buffer_weights=False)

    if dout_pad != dim_out:
        out = out[:, :dim_out]
    return out.reshape(*lead_shape, dim_out)


def reference_forward(x, params):
    """Plain-JAX (f32) transliteration of the PyTorch MLP module."""
    def linear(v, w, b):
        return v @ w.T + b

    def actnorm(v, scale, bias):
        return (v - bias) * jnp.exp(-scale)

    h = jax.nn.relu(actnorm(linear(x, params["w1"], params["b1"]),
                            params["an1_scale"], params["an1_bias"]))
    h = jax.nn.relu(actnorm(linear(h, params["w2"], params["b2"]),
                            params["an2_scale"], params["an2_bias"]))
    return linear(h, params["w3"], params["b3"])


def init_params(key, dim, width, dim_out=None):
    if dim_out is None:
        dim_out = dim
    ks = jax.random.split(key, 10)

    def lin_init(kw, kb, fan_in, fan_out):
        bound = 1.0 / jnp.sqrt(fan_in)
        w = jax.random.uniform(kw, (fan_out, fan_in), jnp.float32, -bound, bound)
        b = jax.random.uniform(kb, (fan_out,), jnp.float32, -bound, bound)
        return w, b

    w1, b1 = lin_init(ks[0], ks[1], dim, width)
    w2, b2 = lin_init(ks[2], ks[3], width, width)
    w3, b3 = lin_init(ks[4], ks[5], width, dim_out)
    # ActNorm params are zeros in __init__; use small nonzero values so the
    # folded normalize path is actually exercised.
    return dict(
        w1=w1, b1=b1,
        an1_scale=0.1 * jax.random.normal(ks[6], (width,), jnp.float32),
        an1_bias=0.1 * jax.random.normal(ks[7], (width,), jnp.float32),
        w2=w2, b2=b2,
        an2_scale=0.1 * jax.random.normal(ks[8], (width,), jnp.float32),
        an2_bias=0.1 * jax.random.normal(ks[9], (width,), jnp.float32),
        w3=w3, b3=b3,
    )


if __name__ == "__main__":
    B, N, DIM, WIDTH = 2, 8, 16, 32
    key = jax.random.PRNGKey(0)
    kx, kp = jax.random.split(key)
    x = jax.random.normal(kx, (B, N, DIM), jnp.float32)
    params = init_params(kp, DIM, WIDTH)

    # Default path: M=16 -> TM is halved to 8 so the grid has 2 steps.
    y = mlp_forward(x, params)
    jax.block_until_ready(y)
    y_ref = reference_forward(x, params)
    assert y.shape == (B, N, DIM)
    # bf16 matmul operands (f32 accumulate) -> relaxed tolerance vs f32 ref.
    assert jnp.allclose(y, y_ref, atol=5e-2, rtol=5e-2), "output mismatch"

    # Ragged-last-block path: M=10 with TM=8 -> grid=2, partial second tile.
    y2 = mlp_forward(x[:, :5], params, tm=8)
    jax.block_until_ready(y2)
    assert jnp.allclose(y2, y_ref[:, :5], atol=5e-2, rtol=5e-2), \
        "output mismatch (ragged)"

    print("KERNEL_OK")
</pallas_src>

<mosaic_0001>
module attributes {stable_mosaic.version = 11 : i64} {
  func.func @_mlp_kernel(%arg0: i32, %arg1: memref<8x16xbf16, #tpu.memory_space<vmem>>, %arg2: memref<16x128xbf16, #tpu.memory_space<vmem>>, %arg3: memref<1x128xf32, #tpu.memory_space<vmem>>, %arg4: memref<128x128xbf16, #tpu.memory_space<vmem>>, %arg5: memref<1x128xf32, #tpu.memory_space<vmem>>, %arg6: memref<128x128xbf16, #tpu.memory_space<vmem>>, %arg7: memref<1x128xf32, #tpu.memory_space<vmem>>, %arg8: memref<8x128xf32, #tpu.memory_space<vmem>>) attributes {dimension_semantics = [#tpu.dimension_semantics<parallel>], iteration_bounds = array<i64: 2>, scalar_prefetch = 0 : i64, scratch_operands = 0 : i64, tpu.core_type = #tpu.core_type<tc>, window_params = [{transform_indices = @transform_0, window_bounds = array<i64: 8, 16>}, {pipeline_mode = #tpu.pipeline_mode<synchronous>, transform_indices = @transform_1, window_bounds = array<i64: 16, 128>}, {pipeline_mode = #tpu.pipeline_mode<synchronous>, transform_indices = @transform_2, window_bounds = array<i64: 1, 128>}, {pipeline_mode = #tpu.pipeline_mode<synchronous>, transform_indices = @transform_3, window_bounds = array<i64: 128, 128>}, {pipeline_mode = #tpu.pipeline_mode<synchronous>, transform_indices = @transform_4, window_bounds = array<i64: 1, 128>}, {pipeline_mode = #tpu.pipeline_mode<synchronous>, transform_indices = @transform_5, window_bounds = array<i64: 128, 128>}, {pipeline_mode = #tpu.pipeline_mode<synchronous>, transform_indices = @transform_6, window_bounds = array<i64: 1, 128>}, {transform_indices = @transform_7, window_bounds = array<i64: 8, 128>}]} {
    %c0 = arith.constant 0 : index
    %c0_0 = arith.constant 0 : index
    %0 = vector.load %arg1[%c0, %c0_0] : memref<8x16xbf16, #tpu.memory_space<vmem>>, vector<8x16xbf16>
    %c0_1 = arith.constant 0 : index
    %c0_2 = arith.constant 0 : index
    %1 = vector.load %arg2[%c0_1, %c0_2] : memref<16x128xbf16, #tpu.memory_space<vmem>>, vector<16x128xbf16>
    %cst = arith.constant dense<0.000000e+00> : vector<8x128xf32>
    %2 = tpu.matmul %0, %1, %cst {dimension_numbers = #tpu.dot_dimension_numbers<[1], [0], [0], [1], [0, 0, 1, 1], [], []>} : vector<8x16xbf16>, vector<16x128xbf16>, vector<8x128xf32> -> vector<8x128xf32>
    %c0_3 = arith.constant 0 : index
    %c0_4 = arith.constant 0 : index
    %3 = vector.load %arg3[%c0_3, %c0_4] : memref<1x128xf32, #tpu.memory_space<vmem>>, vector<1x128xf32>
    %4 = vector.broadcast %3 : vector<1x128xf32> to vector<8x128xf32>
    %5 = arith.addf %2, %4 : vector<8x128xf32>
    %cst_5 = arith.constant 0.000000e+00 : f32
    %6 = vector.broadcast %cst_5 : f32 to vector<8x128xf32>
    %7 = arith.maximumf %5, %6 : vector<8x128xf32>
    %8 = arith.truncf %7 : vector<8x128xf32> to vector<8x128xbf16>
    %c0_6 = arith.constant 0 : index
    %c0_7 = arith.constant 0 : index
    %9 = vector.load %arg4[%c0_6, %c0_7] : memref<128x128xbf16, #tpu.memory_space<vmem>>, vector<128x128xbf16>
    %cst_8 = arith.constant dense<0.000000e+00> : vector<8x128xf32>
    %10 = tpu.matmul %8, %9, %cst_8 {dimension_numbers = #tpu.dot_dimension_numbers<[1], [0], [0], [1], [0, 0, 1, 1], [], []>} : vector<8x128xbf16>, vector<128x128xbf16>, vector<8x128xf32> -> vector<8x128xf32>
    %c0_9 = arith.constant 0 : index
    %c0_10 = arith.constant 0 : index
    %11 = vector.load %arg5[%c0_9, %c0_10] : memref<1x128xf32, #tpu.memory_space<vmem>>, vector<1x128xf32>
    %12 = vector.broadcast %11 : vector<1x128xf32> to vector<8x128xf32>
    %13 = arith.addf %10, %12 : vector<8x128xf32>
    %cst_11 = arith.constant 0.000000e+00 : f32
    %14 = vector.broadcast %cst_11 : f32 to vector<8x128xf32>
    %15 = arith.maximumf %13, %14 : vector<8x128xf32>
    %16 = arith.truncf %15 : vector<8x128xf32> to vector<8x128xbf16>
    %c0_12 = arith.constant 0 : index
    %c0_13 = arith.constant 0 : index
    %17 = vector.load %arg6[%c0_12, %c0_13] : memref<128x128xbf16, #tpu.memory_space<vmem>>, vector<128x128xbf16>
    %cst_14 = arith.constant dense<0.000000e+00> : vector<8x128xf32>
    %18 = tpu.matmul %16, %17, %cst_14 {dimension_numbers = #tpu.dot_dimension_numbers<[1], [0], [0], [1], [0, 0, 1, 1], [], []>} : vector<8x128xbf16>, vector<128x128xbf16>, vector<8x128xf32> -> vector<8x128xf32>
    %c0_15 = arith.constant 0 : index
    %c0_16 = arith.constant 0 : index
    %19 = vector.load %arg7[%c0_15, %c0_16] : memref<1x128xf32, #tpu.memory_space<vmem>>, vector<1x128xf32>
    %20 = vector.broadcast %19 : vector<1x128xf32> to vector<8x128xf32>
    %21 = arith.addf %18, %20 : vector<8x128xf32>
    %c0_17 = arith.constant 0 : index
    %c0_18 = arith.constant 0 : index
    %22 = vector.load %arg8[%c0_17, %c0_18] : memref<8x128xf32, #tpu.memory_space<vmem>>, vector<8x128xf32>
    tpu.vector_store %arg8[%c0_17, %c0_18], %21 {strides = array<i32>} : memref<8x128xf32, #tpu.memory_space<vmem>>, vector<8x128xf32>,
    return
  }
  func.func @transform_0(%arg0: i32) -> (i32, i32) {
    %c0_i32 = arith.constant 0 : i32
    %c0_i32_0 = arith.constant 0 : i32
    return %arg0, %c0_i32 : i32, i32
  }
  func.func @transform_1(%arg0: i32) -> (i32, i32) {
    %c0_i32 = arith.constant 0 : i32
    %c0_i32_0 = arith.constant 0 : i32
    %c0_i32_1 = arith.constant 0 : i32
    return %c0_i32, %c0_i32_0 : i32, i32
  }
  func.func @transform_2(%arg0: i32) -> (i32, i32) {
    %c0_i32 = arith.constant 0 : i32
    %c0_i32_0 = arith.constant 0 : i32
    %c0_i32_1 = arith.constant 0 : i32
    return %c0_i32, %c0_i32_0 : i32, i32
  }
  func.func @transform_3(%arg0: i32) -> (i32, i32) {
    %c0_i32 = arith.constant 0 : i32
    %c0_i32_0 = arith.constant 0 : i32
    %c0_i32_1 = arith.constant 0 : i32
    return %c0_i32, %c0_i32_0 : i32, i32
  }
  func.func @transform_4(%arg0: i32) -> (i32, i32) {
    %c0_i32 = arith.constant 0 : i32
    %c0_i32_0 = arith.constant 0 : i32
    %c0_i32_1 = arith.constant 0 : i32
    return %c0_i32, %c0_i32_0 : i32, i32
  }
  func.func @transform_5(%arg0: i32) -> (i32, i32) {
    %c0_i32 = arith.constant 0 : i32
    %c0_i32_0 = arith.constant 0 : i32
    %c0_i32_1 = arith.constant 0 : i32
    return %c0_i32, %c0_i32_0 : i32, i32
  }
  func.func @transform_6(%arg0: i32) -> (i32, i32) {
    %c0_i32 = arith.constant 0 : i32
    %c0_i32_0 = arith.constant 0 : i32
    %c0_i32_1 = arith.constant 0 : i32
    return %c0_i32, %c0_i32_0 : i32, i32
  }
  func.func @transform_7(%arg0: i32) -> (i32, i32) {
    %c0_i32 = arith.constant 0 : i32
    %c0_i32_0 = arith.constant 0 : i32
    return %arg0, %c0_i32 : i32, i32
  }
}

module attributes {stable_mosaic.version = 11 : i64} {
  func.func @_mlp_kernel(%arg0: i32, %arg1: memref<8x16xbf16, #tpu.memory_space<vmem>>, %arg2: memref<16x128xbf16, #tpu.memory_space<vmem>>, %arg3: memref<1x128xf32, #tpu.memory_space<vmem>>, %arg4: memref<128x128xbf16, #tpu.memory_space<vmem>>, %arg5: memref<1x128xf32, #tpu.memory_space<vmem>>, %arg6: memref<128x128xbf16, #tpu.memory_space<vmem>>, %arg7: memref<1x128xf32, #tpu.memory_space<vmem>>, %arg8: memref<8x128xf32, #tpu.memory_space<vmem>>) attributes {dimension_semantics = [#tpu.dimension_semantics<parallel>], iteration_bounds = array<i64: 2>, scalar_prefetch = 0 : i64, scratch_operands = 0 : i64, tpu.core_type = #tpu.core_type<tc>, window_params = [{transform_indices = @transform_0, window_bounds = array<i64: 8, 16>}, {pipeline_mode = #tpu.pipeline_mode<synchronous>, transform_indices = @transform_1, window_bounds = array<i64: 16, 128>}, {pipeline_mode = #tpu.pipeline_mode<synchronous>, transform_indices = @transform_2, window_bounds = array<i64: 1, 128>}, {pipeline_mode = #tpu.pipeline_mode<synchronous>, transform_indices = @transform_3, window_bounds = array<i64: 128, 128>}, {pipeline_mode = #tpu.pipeline_mode<synchronous>, transform_indices = @transform_4, window_bounds = array<i64: 1, 128>}, {pipeline_mode = #tpu.pipeline_mode<synchronous>, transform_indices = @transform_5, window_bounds = array<i64: 128, 128>}, {pipeline_mode = #tpu.pipeline_mode<synchronous>, transform_indices = @transform_6, window_bounds = array<i64: 1, 128>}, {transform_indices = @transform_7, window_bounds = array<i64: 8, 128>}]} {
    %c0 = arith.constant 0 : index
    %c0_0 = arith.constant 0 : index
    %0 = vector.load %arg1[%c0, %c0_0] : memref<8x16xbf16, #tpu.memory_space<vmem>>, vector<8x16xbf16>
    %c0_1 = arith.constant 0 : index
    %c0_2 = arith.constant 0 : index
    %1 = vector.load %arg2[%c0_1, %c0_2] : memref<16x128xbf16, #tpu.memory_space<vmem>>, vector<16x128xbf16>
    %cst = arith.constant dense<0.000000e+00> : vector<8x128xf32>
    %2 = tpu.matmul %0, %1, %cst {dimension_numbers = #tpu.dot_dimension_numbers<[1], [0], [0], [1], [0, 0, 1, 1], [], []>} : vector<8x16xbf16>, vector<16x128xbf16>, vector<8x128xf32> -> vector<8x128xf32>
    %c0_3 = arith.constant 0 : index
    %c0_4 = arith.constant 0 : index
    %3 = vector.load %arg3[%c0_3, %c0_4] : memref<1x128xf32, #tpu.memory_space<vmem>>, vector<1x128xf32>
    %4 = vector.broadcast %3 : vector<1x128xf32> to vector<8x128xf32>
    %5 = arith.addf %2, %4 : vector<8x128xf32>
    %cst_5 = arith.constant 0.000000e+00 : f32
    %6 = vector.broadcast %cst_5 : f32 to vector<8x128xf32>
    %7 = arith.maximumf %5, %6 : vector<8x128xf32>
    %8 = arith.truncf %7 : vector<8x128xf32> to vector<8x128xbf16>
    %c0_6 = arith.constant 0 : index
    %c0_7 = arith.constant 0 : index
    %9 = vector.load %arg4[%c0_6, %c0_7] : memref<128x128xbf16, #tpu.memory_space<vmem>>, vector<128x128xbf16>
    %cst_8 = arith.constant dense<0.000000e+00> : vector<8x128xf32>
    %10 = tpu.matmul %8, %9, %cst_8 {dimension_numbers = #tpu.dot_dimension_numbers<[1], [0], [0], [1], [0, 0, 1, 1], [], []>} : vector<8x128xbf16>, vector<128x128xbf16>, vector<8x128xf32> -> vector<8x128xf32>
    %c0_9 = arith.constant 0 : index
    %c0_10 = arith.constant 0 : index
    %11 = vector.load %arg5[%c0_9, %c0_10] : memref<1x128xf32, #tpu.memory_space<vmem>>, vector<1x128xf32>
    %12 = vector.broadcast %11 : vector<1x128xf32> to vector<8x128xf32>
    %13 = arith.addf %10, %12 : vector<8x128xf32>
    %cst_11 = arith.constant 0.000000e+00 : f32
    %14 = vector.broadcast %cst_11 : f32 to vector<8x128xf32>
    %15 = arith.maximumf %13, %14 : vector<8x128xf32>
    %16 = arith.truncf %15 : vector<8x128xf32> to vector<8x128xbf16>
    %c0_12 = arith.constant 0 : index
    %c0_13 = arith.constant 0 : index
    %17 = vector.load %arg6[%c0_12, %c0_13] : memref<128x128xbf16, #tpu.memory_space<vmem>>, vector<128x128xbf16>
    %cst_14 = arith.constant dense<0.000000e+00> : vector<8x128xf32>
    %18 = tpu.matmul %16, %17, %cst_14 {dimension_numbers = #tpu.dot_dimension_numbers<[1], [0], [0], [1], [0, 0, 1, 1], [], []>} : vector<8x128xbf16>, vector<128x128xbf16>, vector<8x128xf32> -> vector<8x128xf32>
    %c0_15 = arith.constant 0 : index
    %c0_16 = arith.constant 0 : index
    %19 = vector.load %arg7[%c0_15, %c0_16] : memref<1x128xf32, #tpu.memory_space<vmem>>, vector<1x128xf32>
    %20 = vector.broadcast %19 : vector<1x128xf32> to vector<8x128xf32>
    %21 = arith.addf %18, %20 : vector<8x128xf32>
    %c0_17 = arith.constant 0 : index
    %c0_18 = arith.constant 0 : index
    %22 = vector.load %arg8[%c0_17, %c0_18] : memref<8x128xf32, #tpu.memory_space<vmem>>, vector<8x128xf32>
    tpu.vector_store %arg8[%c0_17, %c0_18], %21 {strides = array<i32>} : memref<8x128xf32, #tpu.memory_space<vmem>>, vector<8x128xf32>,
    return
  }
  func.func @transform_0(%arg0: i32) -> (i32, i32) {
    %c0_i32 = arith.constant 0 : i32
    %c0_i32_0 = arith.constant 0 : i32
    return %arg0, %c0_i32 : i32, i32
  }
  func.func @transform_1(%arg0: i32) -> (i32, i32) {
    %c0_i32 = arith.constant 0 : i32
    %c0_i32_0 = arith.constant 0 : i32
    %c0_i32_1 = arith.constant 0 : i32
    return %c0_i32, %c0_i32_0 : i32, i32
  }
  func.func @transform_2(%arg0: i32) -> (i32, i32) {
    %c0_i32 = arith.constant 0 : i32
    %c0_i32_0 = arith.constant 0 : i32
    %c0_i32_1 = arith.constant 0 : i32
    return %c0_i32, %c0_i32_0 : i32, i32
  }
  func.func @transform_3(%arg0: i32) -> (i32, i32) {
    %c0_i32 = arith.constant 0 : i32
    %c0_i32_0 = arith.constant 0 : i32
    %c0_i32_1 = arith.constant 0 : i32
    return %c0_i32, %c0_i32_0 : i32, i32
  }
  func.func @transform_4(%arg0: i32) -> (i32, i32) {
    %c0_i32 = arith.constant 0 : i32
    %c0_i32_0 = arith.constant 0 : i32
    %c0_i32_1 = arith.constant 0 : i32
    return %c0_i32, %c0_i32_0 : i32, i32
  }
  func.func @transform_5(%arg0: i32) -> (i32, i32) {
    %c0_i32 = arith.constant 0 : i32
    %c0_i32_0 = arith.constant 0 : i32
    %c0_i32_1 = arith.constant 0 : i32
    return %c0_i32, %c0_i32_0 : i32, i32
  }
  func.func @transform_6(%arg0: i32) -> (i32, i32) {
    %c0_i32 = arith.constant 0 : i32
    %c0_i32_0 = arith.constant 0 : i32
    %c0_i32_1 = arith.constant 0 : i32
    return %c0_i32, %c0_i32_0 : i32, i32
  }
  func.func @transform_7(%arg0: i32) -> (i32, i32) {
    %c0_i32 = arith.constant 0 : i32
    %c0_i32_0 = arith.constant 0 : i32
    return %arg0, %c0_i32 : i32, i32
  }
}

</mosaic_0001>

<llo_original>
// kernel: tpu_custom_call.1
$region0: #{tpu_custom_call.1}
  #allocation0 [shape = 'u32[]', space=smem, size = 0x4, offset = 0x4, fixed_abs, tag = 'smem constant byte address 0x4 - core index']
  #allocation1 [shape = 'u32[144,128]{1,0:T(1,128)}', space=vmem, size = 0x12000, scoped, tag = 'internal scratch']
  %s0 = inlined_call_operand.hbm [shape: bf16[16,16], index: 0, kind: input, shape index: {}]
  %s1 = inlined_call_operand.hbm [shape: bf16[16,128], index: 1, kind: input, shape index: {}]
  %s2 = inlined_call_operand.vmem [shape: f32[1,128], index: 2, kind: input, shape index: {}]
  %s3 = inlined_call_operand.hbm [shape: bf16[128,128], index: 3, kind: input, shape index: {}]
  %s4 = inlined_call_operand.vmem [shape: f32[1,128], index: 4, kind: input, shape index: {}]
  %s5 = inlined_call_operand.hbm [shape: bf16[128,128], index: 5, kind: input, shape index: {}]
  %s6 = inlined_call_operand.vmem [shape: f32[1,128], index: 6, kind: input, shape index: {}]
  %s7 = inlined_call_operand.hbm [shape: f32[16,128], index: 7, kind: output, shape index: {}]
  %s8 = sld [smem:[#allocation0]]
  $region77: #{tpu_custom_call.1} parent=0
    _
  %s10 = ssub.s32 1, %s8
  %s11 = scalar_select 0, %s10, %s8
  $region1: #{tpu_custom_call.1} parent=0
    #allocation2 [shape = 'u8[4096]{0}', space=vmem, size = 0x1000, scoped, tag = 'input window, operand 0']
    #allocation3 [shape = 's32[2]{0}', space=sflag, size = 0x8, scoped, tag = 'scoped memory for tpu_custom_call.1']
    #allocation4 [shape = 's32[2]{0}', space=sflag, size = 0x8, scoped, tag = 'scoped memory for tpu_custom_call.1']
    #allocation5 [shape = 'u8[4096]{0}', space=vmem, size = 0x1000, scoped, tag = 'input window, operand 1, single buffered']
    #allocation6 [shape = 's32[1]{0}', space=sflag, size = 0x4, scoped, tag = 'scoped memory for tpu_custom_call.1']
    #allocation7 [shape = 'u8[32768]{0}', space=vmem, size = 0x8000, scoped, tag = 'input window, operand 3, single buffered']
    #allocation8 [shape = 'u8[32768]{0}', space=vmem, size = 0x8000, scoped, tag = 'input window, operand 5, single buffered']
    #allocation9 [shape = 's32[1]{0}', space=sflag, size = 0x4, scoped, tag = 'scoped memory for tpu_custom_call.1']
    #allocation10 [shape = 'u8[8192]{0}', space=vmem, size = 0x2000, scoped, tag = 'output window, operand 0']
    %12 = vsyncpa [#allocation3], 0
    %s13 = scalar_lea.sflag [#allocation3], 1
    %14 = vsyncpa %s13, 0
    %15 = vsyncpa [#allocation6], 0
    %16 = vsyncpa [#allocation9], 0
    %17 = vsyncpa [#allocation4], 0
    %s18 = scalar_lea.sflag [#allocation4], 1
    %19 = vsyncpa %s18, 0
    loop: start=0, step=1, limit=4
    $region2: #{tpu_custom_call.1} parent=1 // loop_pre_header
      _
    $region3: #{tpu_custom_call.1} parent=1 // loop_header
      %s21 = sphi 0, %s25
      %p22 = scmp.ge.s32.totalorder %s21, 4
      %s31 = sphi 0, %s33
      %s34 = sphi 0, %s31
      %s35 = sphi 0, %s34
      %s51 = sphi 0, %s35
      %s55 = sphi 0, %s55
      %s57 = sphi 0, %s55
      %s58 = sphi 0, %s57
      %s72 = sphi 0, %s58
      %s76 = sphi 0, %s76
      %s78 = sphi 0, %s76
      %s79 = sphi 0, %s78
      %s93 = sphi 0, %s79
      %s97 = sphi 0, %s97
      %s99 = sphi 0, %s97
      %s100 = sphi 0, %s99
      %s114 = sphi 0, %s100
      %s118 = sphi 0, %s118
      %s120 = sphi 0, %s118
      %s121 = sphi 0, %s120
      %s135 = sphi 0, %s121
      %s139 = sphi 0, %s139
      %s141 = sphi 0, %s139
      %s142 = sphi 0, %s141
      %s156 = sphi 0, %s142
      %s160 = sphi 0, %s160
      %s162 = sphi 0, %s160
      %s163 = sphi 0, %s162
      %s177 = sphi 0, %s163
      %s183 = sphi 0, %s185
      %s186 = sphi 0, %s183
      %s187 = sphi 0, %s186
      %s203 = sphi 0, %s187
    $region4: #{tpu_custom_call.1} parent=1 // loop_header_branch
      %24 = sbr.rel (%p22) target = $region8
    $region5: #{tpu_custom_call.1} parent=1 // loop_body
      %s26 = ssub.s32 %s21, 1
      %s27 = ssub.s32 %s21, 2
      %s28 = sadd.s32 %s21, 1
      %s29 = ssub.s32 %s21, %s28
      %p30 = scmp.eq.s32.totalorder %s29, 0
      %s32 = sadd.s32 %s31, 1
      %s33 = scalar_select %p30, %s31, %s32
      %p36 = pneg %p30
      %p37 = scmp.eq.s32.totalorder %s21, 1
      %p38 = por %p36, %p37
      %p39 = scmp.ne.s32.totalorder %s31, %s34
      %p40 = scmp.eq.s32.totalorder %s21, 0
      %p41 = por %p39, %p40
      %p42 = scmp.ne.s32.totalorder %s31, %s34
      %p43 = scmp.eq.s32.totalorder %s26, 1
      %p44 = por %p42, %p43
      %p45 = scmp.ne.s32.totalorder %s34, %s35
      %p46 = scmp.eq.s32.totalorder %s26, 0
      %p47 = por %p45, %p46
      %p48 = scmp.ne.s32.totalorder %s34, %s35
      %p49 = scmp.eq.s32.totalorder %s27, 1
      %p50 = por %p48, %p49
      %p52 = scmp.ne.s32.totalorder %s35, %s51
      %p53 = scmp.eq.s32.totalorder %s27, 0
      %p54 = por %p52, %p53
      %s56 = sadd.s32 %s55, 1
      %p59 = scmp.eq.s32.totalorder %s21, 1
      %p60 = scmp.ne.s32.totalorder %s55, %s57
      %p61 = scmp.eq.s32.totalorder %s21, 0
      %p62 = por %p60, %p61
      %p63 = scmp.ne.s32.totalorder %s55, %s57
      %p64 = scmp.eq.s32.totalorder %s26, 1
      %p65 = por %p63, %p64
      %p66 = scmp.ne.s32.totalorder %s57, %s58
      %p67 = scmp.eq.s32.totalorder %s26, 0
      %p68 = por %p66, %p67
      %p69 = scmp.ne.s32.totalorder %s57, %s58
      %p70 = scmp.eq.s32.totalorder %s27, 1
      %p71 = por %p69, %p70
      %p73 = scmp.ne.s32.totalorder %s58, %s72
      %p74 = scmp.eq.s32.totalorder %s27, 0
      %p75 = por %p73, %p74
      %s77 = sadd.s32 %s76, 1
      %p80 = scmp.eq.s32.totalorder %s21, 1
      %p81 = scmp.ne.s32.totalorder %s76, %s78
      %p82 = scmp.eq.s32.totalorder %s21, 0
      %p83 = por %p81, %p82
      %p84 = scmp.ne.s32.totalorder %s76, %s78
      %p85 = scmp.eq.s32.totalorder %s26, 1
      %p86 = por %p84, %p85
      %p87 = scmp.ne.s32.totalorder %s78, %s79
      %p88 = scmp.eq.s32.totalorder %s26, 0
      %p89 = por %p87, %p88
      %p90 = scmp.ne.s32.totalorder %s78, %s79
      %p91 = scmp.eq.s32.totalorder %s27, 1
      %p92 = por %p90, %p91
      %p94 = scmp.ne.s32.totalorder %s79, %s93
      %p95 = scmp.eq.s32.totalorder %s27, 0
      %p96 = por %p94, %p95
      %s98 = sadd.s32 %s97, 1
      %p101 = scmp.eq.s32.totalorder %s21, 1
      %p102 = scmp.ne.s32.totalorder %s97, %s99
      %p103 = scmp.eq.s32.totalorder %s21, 0
      %p104 = por %p102, %p103
      %p105 = scmp.ne.s32.totalorder %s97, %s99
      %p106 = scmp.eq.s32.totalorder %s26, 1
      %p107 = por %p105, %p106
      %p108 = scmp.ne.s32.totalorder %s99, %s100
      %p109 = scmp.eq.s32.totalorder %s26, 0
      %p110 = por %p108, %p109
      %p111 = scmp.ne.s32.totalorder %s99, %s100
      %p112 = scmp.eq.s32.totalorder %s27, 1
      %p113 = por %p111, %p112
      %p115 = scmp.ne.s32.totalorder %s100, %s114
      %p116 = scmp.eq.s32.totalorder %s27, 0
      %p117 = por %p115, %p116
      %s119 = sadd.s32 %s118, 1
      %p122 = scmp.eq.s32.totalorder %s21, 1
      %p123 = scmp.ne.s32.totalorder %s118, %s120
      %p124 = scmp.eq.s32.totalorder %s21, 0
      %p125 = por %p123, %p124
      %p126 = scmp.ne.s32.totalorder %s118, %s120
      %p127 = scmp.eq.s32.totalorder %s26, 1
      %p128 = por %p126, %p127
      %p129 = scmp.ne.s32.totalorder %s120, %s121
      %p130 = scmp.eq.s32.totalorder %s26, 0
      %p131 = por %p129, %p130
      %p132 = scmp.ne.s32.totalorder %s120, %s121
      %p133 = scmp.eq.s32.totalorder %s27, 1
      %p134 = por %p132, %p133
      %p136 = scmp.ne.s32.totalorder %s121, %s135
      %p137 = scmp.eq.s32.totalorder %s27, 0
      %p138 = por %p136, %p137
      %s140 = sadd.s32 %s139, 1
      %p143 = scmp.eq.s32.totalorder %s21, 1
      %p144 = scmp.ne.s32.totalorder %s139, %s141
      %p145 = scmp.eq.s32.totalorder %s21, 0
      %p146 = por %p144, %p145
      %p147 = scmp.ne.s32.totalorder %s139, %s141
      %p148 = scmp.eq.s32.totalorder %s26, 1
      %p149 = por %p147, %p148
      %p150 = scmp.ne.s32.totalorder %s141, %s142
      %p151 = scmp.eq.s32.totalorder %s26, 0
      %p152 = por %p150, %p151
      %p153 = scmp.ne.s32.totalorder %s141, %s142
      %p154 = scmp.eq.s32.totalorder %s27, 1
      %p155 = por %p153, %p154
      %p157 = scmp.ne.s32.totalorder %s142, %s156
      %p158 = scmp.eq.s32.totalorder %s27, 0
      %p159 = por %p157, %p158
      %s161 = sadd.s32 %s160, 1
      %p164 = scmp.eq.s32.totalorder %s21, 1
      %p165 = scmp.ne.s32.totalorder %s160, %s162
      %p166 = scmp.eq.s32.totalorder %s21, 0
      %p167 = por %p165, %p166
      %p168 = scmp.ne.s32.totalorder %s160, %s162
      %p169 = scmp.eq.s32.totalorder %s26, 1
      %p170 = por %p168, %p169
      %p171 = scmp.ne.s32.totalorder %s162, %s163
      %p172 = scmp.eq.s32.totalorder %s26, 0
      %p173 = por %p171, %p172
      %p174 = scmp.ne.s32.totalorder %s162, %s163
      %p175 = scmp.eq.s32.totalorder %s27, 1
      %p176 = por %p174, %p175
      %p178 = scmp.ne.s32.totalorder %s163, %s177
      %p179 = scmp.eq.s32.totalorder %s27, 0
      %p180 = por %p178, %p179
      %s181 = ssub.s32 %s21, %s28
      %p182 = scmp.eq.s32.totalorder %s181, 0
      %s184 = sadd.s32 %s183, 1
      %s185 = scalar_select %p182, %s183, %s184
      %p188 = pneg %p182
      %p189 = scmp.eq.s32.totalorder %s21, 1
      %p190 = por %p188, %p189
      %p191 = scmp.ne.s32.totalorder %s183, %s186
      %p192 = scmp.eq.s32.totalorder %s21, 0
      %p193 = por %p191, %p192
      %p194 = scmp.ne.s32.totalorder %s183, %s186
      %p195 = scmp.eq.s32.totalorder %s26, 1
      %p196 = por %p194, %p195
      %p197 = scmp.ne.s32.totalorder %s186, %s187
      %p198 = scmp.eq.s32.totalorder %s26, 0
      %p199 = por %p197, %p198
      %p200 = scmp.ne.s32.totalorder %s186, %s187
      %p201 = scmp.eq.s32.totalorder %s27, 1
      %p202 = por %p200, %p201
      %p204 = scmp.ne.s32.totalorder %s187, %s203
      %p205 = scmp.eq.s32.totalorder %s27, 0
      %p206 = por %p204, %p205
      %p207 = scmp.le.s32.totalorder 1, %s21
      %p208 = scmp.lt.s32.totalorder %s21, 3
      %p209 = pnand %p207, %p208
      %p210 = pneg %p209
      // Predicated region
      $region9: #{tpu_custom_call.1} parent=5 // pred_check
        _
      $region10: #{tpu_custom_call.1} parent=5 // pred_check_branch
        %212 = sbr.rel (%p209) target = $region12
      $region11: #{tpu_custom_call.1} parent=5 // pred_region
        %s213 = ssub.s32 %s21, 1
        // Predicated region
        $region13: #{tpu_custom_call.1} parent=11 // pred_check
          %p214 = pneg %p68
        $region14: #{tpu_custom_call.1} parent=11 // pred_check_branch
          %216 = sbr.rel (%p214) target = $region16
        $region15: #{tpu_custom_call.1} parent=11 // pred_region
          %s218 = ssub.s32 128, 128
          %219 = vsyncadd [#allocation6], %s218
          %s220 = sshll.u32 [#allocation5], 4
          %s221 = int_to_ptr.vmem [resolvable:$true] %s220
          %226 = dma.hbm_to_vmem [thread:$0]  %s1, 128, %s221, [#allocation6], 64, 64, 4
        $region16: #{tpu_custom_call.1} parent=11 // pred_fallthru
          _
        // Predicated region
        $region17: #{tpu_custom_call.1} parent=11 // pred_check
          %p227 = pneg %p89
        $region18: #{tpu_custom_call.1} parent=11 // pred_check_branch
          %229 = sbr.rel (%p227) target = $region20
        $region19: #{tpu_custom_call.1} parent=11 // pred_region
          _
        $region20: #{tpu_custom_call.1} parent=11 // pred_fallthru
          _
        // Predicated region
        $region21: #{tpu_custom_call.1} parent=11 // pred_check
          %p230 = pneg %p110
        $region22: #{tpu_custom_call.1} parent=11 // pred_check_branch
          %232 = sbr.rel (%p230) target = $region24
        $region23: #{tpu_custom_call.1} parent=11 // pred_region
          %s234 = ssub.s32 1024, 1024
          %235 = vsyncadd [#allocation6], %s234
          %s236 = sshll.u32 [#allocation7], 4
          %s237 = int_to_ptr.vmem [resolvable:$true] %s236
          %242 = dma.hbm_to_vmem [thread:$0]  %s3, 1024, %s237, [#allocation6], 64, 64, 4
        $region24: #{tpu_custom_call.1} parent=11 // pred_fallthru
          _
        // Predicated region
        $region25: #{tpu_custom_call.1} parent=11 // pred_check
          %p243 = pneg %p131
        $region26: #{tpu_custom_call.1} parent=11 // pred_check_branch
          %245 = sbr.rel (%p243) target = $region28
        $region27: #{tpu_custom_call.1} parent=11 // pred_region
          _
        $region28: #{tpu_custom_call.1} parent=11 // pred_fallthru
          _
        // Predicated region
        $region29: #{tpu_custom_call.1} parent=11 // pred_check
          %p246 = pneg %p152
        $region30: #{tpu_custom_call.1} parent=11 // pred_check_branch
          %248 = sbr.rel (%p246) target = $region32
        $region31: #{tpu_custom_call.1} parent=11 // pred_region
          %s250 = ssub.s32 1024, 1024
          %251 = vsyncadd [#allocation9], %s250
          %s252 = sshll.u32 [#allocation8], 4
          %s253 = int_to_ptr.vmem [resolvable:$true] %s252
          %258 = dma.hbm_to_vmem [thread:$0]  %s5, 1024, %s253, [#allocation9], 64, 64, 4
        $region32: #{tpu_custom_call.1} parent=11 // pred_fallthru
          _
        // Predicated region
        $region33: #{tpu_custom_call.1} parent=11 // pred_check
          %p259 = pneg %p173
        $region34: #{tpu_custom_call.1} parent=11 // pred_check_branch
          %261 = sbr.rel (%p259) target = $region36
        $region35: #{tpu_custom_call.1} parent=11 // pred_region
          _
        $region36: #{tpu_custom_call.1} parent=11 // pred_fallthru
          _
      $region12: #{tpu_custom_call.1} parent=5 // pred_fallthru
        _
      %p262 = scmp.lt.s32.totalorder %s21, 2
      // Predicated region
      $region37: #{tpu_custom_call.1} parent=5 // pred_check
        %p263 = pneg %p262
      $region38: #{tpu_custom_call.1} parent=5 // pred_check_branch
        %265 = sbr.rel (%p263) target = $region40
      $region39: #{tpu_custom_call.1} parent=5 // pred_region
        // Predicated region
        $region41: #{tpu_custom_call.1} parent=39 // pred_check
          %p266 = pneg %p41
        $region42: #{tpu_custom_call.1} parent=39 // pred_check_branch
          %268 = sbr.rel (%p266) target = $region44
        $region43: #{tpu_custom_call.1} parent=39 // pred_region
          %s269 = sand.u32 %s31, 1
          %s270 = scalar_lea.sflag [#allocation3], %s269
          %s271 = sand.u32 %s31, 1
          %s272 = smul.addr %s271, 4
          %s273 = scalar_lea.vmem [#allocation2], %s272
          %s275 = ssub.s32 64, 64
          %276 = vsyncadd %s270, %s275
          %s277 = smul.addr %s21, 64
          %s278 = scalar_lea.hbm %s0, %s277
          %s280 = sshll.u32 %s273, 4
          %s281 = int_to_ptr.vmem [resolvable:$true] %s280
          %283 = dma.hbm_to_vmem [thread:$0]  %s278, 64, %s281, %s270
        $region44: #{tpu_custom_call.1} parent=39 // pred_fallthru
          _
      $region40: #{tpu_custom_call.1} parent=5 // pred_fallthru
        _
      %p284 = scmp.le.s32.totalorder 1, %s21
      %p285 = scmp.lt.s32.totalorder %s21, 3
      %p286 = pnand %p284, %p285
      %p287 = pneg %p286
      // Predicated region
      $region45: #{tpu_custom_call.1} parent=5 // pred_check
        _
      $region46: #{tpu_custom_call.1} parent=5 // pred_check_branch
        %289 = sbr.rel (%p286) target = $region48
      $region47: #{tpu_custom_call.1} parent=5 // pred_region
        %s290 = ssub.s32 %s21, 1
        %s291 = sand.u32 %s34, 1
        %s292 = scalar_lea.sflag [#allocation3], %s291
        %s293 = sand.u32 %s34, 1
        %s294 = smul.addr %s293, 4
        %s295 = scalar_lea.vmem [#allocation2], %s294
        // Predicated region
        $region49: #{tpu_custom_call.1} parent=47 // pred_check
          %p296 = pneg %p47
        $region50: #{tpu_custom_call.1} parent=47 // pred_check_branch
          %298 = sbr.rel (%p296) target = $region52
        $region51: #{tpu_custom_call.1} parent=47 // pred_region
          %299 = dma.done %s292, 64
        $region52: #{tpu_custom_call.1} parent=47 // pred_fallthru
          _
        // Predicated region
        $region53: #{tpu_custom_call.1} parent=47 // pred_check
          %p300 = pneg %p68
        $region54: #{tpu_custom_call.1} parent=47 // pred_check_branch
          %302 = sbr.rel (%p300) target = $region56
        $region55: #{tpu_custom_call.1} parent=47 // pred_region
          %303 = dma.done [#allocation6], 128
        $region56: #{tpu_custom_call.1} parent=47 // pred_fallthru
          _
        // Predicated region
        $region57: #{tpu_custom_call.1} parent=47 // pred_check
          %p304 = pneg %p110
        $region58: #{tpu_custom_call.1} parent=47 // pred_check_branch
          %306 = sbr.rel (%p304) target = $region60
        $region59: #{tpu_custom_call.1} parent=47 // pred_region
          %307 = dma.done [#allocation6], 1024
        $region60: #{tpu_custom_call.1} parent=47 // pred_fallthru
          _
        // Predicated region
        $region61: #{tpu_custom_call.1} parent=47 // pred_check
          %p308 = pneg %p152
        $region62: #{tpu_custom_call.1} parent=47 // pred_check_branch
          %310 = sbr.rel (%p308) target = $region64
        $region63: #{tpu_custom_call.1} parent=47 // pred_region
          %311 = dma.done [#allocation9], 1024
        $region64: #{tpu_custom_call.1} parent=47 // pred_fallthru
          _
        %s312 = sand.u32 %s34, 1
        %s313 = scalar_lea.sflag [#allocation3], %s312
        %s314 = sand.u32 %s34, 1
        %s315 = smul.addr %s314, 4
        %s316 = scalar_lea.vmem [#allocation2], %s315
        %p317 = pneg %p47
        %p318 = pneg %p44
        %p319 = pneg %p68
        %p320 = pneg %p65
        %p321 = pneg %p89
        %p322 = pneg %p86
        %p323 = pneg %p110
        %p324 = pneg %p107
        %p325 = pneg %p131
        %p326 = pneg %p128
        %p327 = pneg %p152
        %p328 = pneg %p149
        %p329 = pneg %p173
        %p330 = pneg %p170
        %p331 = pneg %p199
        %p332 = pneg %p196
        %s333 = sand.u32 %s186, 1
        %s334 = scalar_lea.sflag [#allocation4], %s333
        %s335 = sand.u32 %s186, 1
        %s336 = smul.addr %s335, 8
        %s337 = scalar_lea.vmem [#allocation10], %s336
        %v339 = vld [vmem:[%s295] sm:$0xf]
        %v340 = vld [vmem:[#allocation5] sm:$0xf]
        %v341 = vld [vmem:[#allocation5 + $0x4] sm:$0xf]
        %v342 = vld [vmem:[%s2] sm:$0x1]
        %v344 = vlaneseq
        %v345 = vshrl.u32 %v344, 7
        %v346 = vsub.s32 0, %v345
        %v347 = vrot.slane %v342, %v346
        %v351 = vunpack.c.l.b16 %v340
        %v352 = vunpack.c.l.b16 %v341
        %v353 = vpack.c.b16 %v352, %v351
        %vm355 = vcmask 130048
        %v357 = vsel %vm355, %v339, 0
        %359 = vmatprep.subr.bf16.mxu0 0
        %360 = vmatpush1.bf16.msra.mxu0 0
        %361 = vmatprep.subr.bf16.mxu0 0
        %362 = vmatpush1.bf16.msra.mxu0 0
        %363 = vmatprep.subr.bf16.mxu0 0
        %364 = vmatpush1.bf16.msra.mxu0 0
        %365 = vmatprep.subr.bf16.mxu0 0
        %366 = vmatpush1.bf16.msra.mxu0 0
        %367 = vmatprep.subr.bf16.mxu0 0
        %368 = vmatpush1.bf16.msra.mxu0 0
        %369 = vmatprep.subr.bf16.mxu0 0
        %370 = vmatpush1.bf16.msra.mxu0 0
        %371 = vmatprep.subr.bf16.mxu0 0
        %372 = vmatpush1.bf16.msra.mxu0 0
        %373 = vmatprep.subr.bf16.mxu0 0
        %374 = vmatpush1.bf16.msra.mxu0 %v353
        %375 = vmatprep.subr.bf16.mxu0 0
        %376 = vmatpush2.bf16.msra.mxu0 0
        %377 = vmatprep.subr.bf16.mxu0 0
        %378 = vmatpush2.bf16.msra.mxu0 0
        %379 = vmatprep.subr.bf16.mxu0 0
        %380 = vmatpush2.bf16.msra.mxu0 0
        %381 = vmatprep.subr.bf16.mxu0 0
        %382 = vmatpush2.bf16.msra.mxu0 0
        %383 = vmatprep.subr.bf16.mxu0 0
        %384 = vmatpush2.bf16.msra.mxu0 0
        %385 = vmatprep.subr.bf16.mxu0 0
        %386 = vmatpush2.bf16.msra.mxu0 0
        %387 = vmatprep.subr.bf16.mxu0 0
        %388 = vmatpush2.bf16.msra.mxu0 0
        %389 = vmatprep.subr.bf16.mxu0 0
        %390 = vmatpush2.bf16.msra.mxu0 0
        %391 = vmatprep.mubr.bf16.mxu0 0
        %392 = vmatmul.mubr.bf16.gmra.mxu0 %v357
        %v393 = vpop.f32.mrf.mxu0
        %v394 = vadd.f32 %v347, %v393
        %v395 = vpop.f32.mrf.mxu0
        %v396 = vpop.f32.mrf.mxu0
        %v397 = vpop.f32.mrf.mxu0
        %398 = vdwg.mxu0
        %v399 = vmax.f32 %v394, 0.0
        %v400 = vpack.c.bf16 %v399, %v399
        %v401 = vld [vmem:[#allocation7] sm:$0xf]
        %v402 = vld [vmem:[#allocation7 + $0x4] sm:$0xf]
        %v403 = vld [vmem:[#allocation7 + $0x8] sm:$0xf]
        %v404 = vld [vmem:[#allocation7 + $0xc] sm:$0xf]
        %v405 = vld [vmem:[#allocation7 + $0x10] sm:$0xf]
        %v406 = vld [vmem:[#allocation7 + $0x14] sm:$0xf]
        %v407 = vld [vmem:[#allocation7 + $0x18] sm:$0xf]
        %v408 = vld [vmem:[#allocation7 + $0x1c] sm:$0xf]
        %v409 = vld [vmem:[#allocation7 + $0x20] sm:$0xf]
        %v410 = vld [vmem:[#allocation7 + $0x24] sm:$0xf]
        %v411 = vld [vmem:[#allocation7 + $0x28] sm:$0xf]
        %v412 = vld [vmem:[#allocation7 + $0x2c] sm:$0xf]
        %v413 = vld [vmem:[#allocation7 + $0x30] sm:$0xf]
        %v414 = vld [vmem:[#allocation7 + $0x34] sm:$0xf]
        %v415 = vld [vmem:[#allocation7 + $0x38] sm:$0xf]
        %v416 = vld [vmem:[#allocation7 + $0x3c] sm:$0xf]
        %v417 = vld [vmem:[%s4] sm:$0x1]
        %v419 = vlaneseq
        %v420 = vshrl.u32 %v419, 7
        %v421 = vsub.s32 0, %v420
        %v422 = vrot.slane %v417, %v421
        %v440 = vunpack.c.l.b16 %v401
        %v441 = vunpack.c.l.b16 %v402
        %v442 = vunpack.c.l.b16 %v403
        %v443 = vunpack.c.l.b16 %v404
        %v444 = vunpack.c.l.b16 %v405
        %v445 = vunpack.c.l.b16 %v406
        %v446 = vunpack.c.l.b16 %v407
        %v447 = vunpack.c.l.b16 %v408
        %v448 = vunpack.c.l.b16 %v409
        %v449 = vunpack.c.l.b16 %v410
        %v450 = vunpack.c.l.b16 %v411
        %v451 = vunpack.c.l.b16 %v412
        %v452 = vunpack.c.l.b16 %v413
        %v453 = vunpack.c.l.b16 %v414
        %v454 = vunpack.c.l.b16 %v415
        %v455 = vunpack.c.l.b16 %v416
        %v456 = vpack.c.b16 %v441, %v440
        %v457 = vpack.c.b16 %v443, %v442
        %v458 = vpack.c.b16 %v445, %v444
        %v459 = vpack.c.b16 %v447, %v446
        %v460 = vpack.c.b16 %v449, %v448
        %v461 = vpack.c.b16 %v451, %v450
        %v462 = vpack.c.b16 %v453, %v452
        %v463 = vpack.c.b16 %v455, %v454
        %472 = vmatprep.subr.bf16.mxu0 0
        %473 = vmatpush1.bf16.msra.mxu0 %v463
        %474 = vmatprep.subr.bf16.mxu0 0
        %475 = vmatpush1.bf16.msra.mxu0 %v462
        %476 = vmatprep.subr.bf16.mxu0 0
        %477 = vmatpush1.bf16.msra.mxu0 %v461
        %478 = vmatprep.subr.bf16.mxu0 0
        %479 = vmatpush1.bf16.msra.mxu0 %v460
        %480 = vmatprep.subr.bf16.mxu0 0
        %481 = vmatpush1.bf16.msra.mxu0 %v459
        %482 = vmatprep.subr.bf16.mxu0 0
        %483 = vmatpush1.bf16.msra.mxu0 %v458
        %484 = vmatprep.subr.bf16.mxu0 0
        %485 = vmatpush1.bf16.msra.mxu0 %v457
        %486 = vmatprep.subr.bf16.mxu0 0
        %487 = vmatpush1.bf16.msra.mxu0 %v456
        %488 = vmatprep.subr.bf16.mxu0 0
        %489 = vmatpush2.bf16.msra.mxu0 0
        %490 = vmatprep.subr.bf16.mxu0 0
        %491 = vmatpush2.bf16.msra.mxu0 0
        %492 = vmatprep.subr.bf16.mxu0 0
        %493 = vmatpush2.bf16.msra.mxu0 0
        %494 = vmatprep.subr.bf16.mxu0 0
        %495 = vmatpush2.bf16.msra.mxu0 0
        %496 = vmatprep.subr.bf16.mxu0 0
        %497 = vmatpush2.bf16.msra.mxu0 0
        %498 = vmatprep.subr.bf16.mxu0 0
        %499 = vmatpush2.bf16.msra.mxu0 0
        %500 = vmatprep.subr.bf16.mxu0 0
        %501 = vmatpush2.bf16.msra.mxu0 0
        %502 = vmatprep.subr.bf16.mxu0 0
        %503 = vmatpush2.bf16.msra.mxu0 0
        %504 = vmatprep.mubr.bf16.mxu0 0
        %505 = vmatmul.mubr.bf16.gmra.mxu0 %v400
        %v506 = vpop.f32.mrf.mxu0
        %v507 = vadd.f32 %v422, %v506
        %v508 = vpop.f32.mrf.mxu0
        %v509 = vpop.f32.mrf.mxu0
        %v510 = vpop.f32.mrf.mxu0
        %511 = vdwg.mxu0
        %v512 = vmax.f32 %v507, 0.0
        %v513 = vpack.c.bf16 %v512, %v512
        %v514 = vld [vmem:[#allocation8] sm:$0xf]
        %v515 = vld [vmem:[#allocation8 + $0x4] sm:$0xf]
        %v516 = vld [vmem:[#allocation8 + $0x8] sm:$0xf]
        %v517 = vld [vmem:[#allocation8 + $0xc] sm:$0xf]
        %v518 = vld [vmem:[#allocation8 + $0x10] sm:$0xf]
        %v519 = vld [vmem:[#allocation8 + $0x14] sm:$0xf]
        %v520 = vld [vmem:[#allocation8 + $0x18] sm:$0xf]
        %v521 = vld [vmem:[#allocation8 + $0x1c] sm:$0xf]
        %v522 = vld [vmem:[#allocation8 + $0x20] sm:$0xf]
        %v523 = vld [vmem:[#allocation8 + $0x24] sm:$0xf]
        %v524 = vld [vmem:[#allocation8 + $0x28] sm:$0xf]
        %v525 = vld [vmem:[#allocation8 + $0x2c] sm:$0xf]
        %v526 = vld [vmem:[#allocation8 + $0x30] sm:$0xf]
        %v527 = vld [vmem:[#allocation8 + $0x34] sm:$0xf]
        %v528 = vld [vmem:[#allocation8 + $0x38] sm:$0xf]
        %v529 = vld [vmem:[#allocation8 + $0x3c] sm:$0xf]
        %v530 = vld [vmem:[%s6] sm:$0x1]
        %v532 = vlaneseq
        %v533 = vshrl.u32 %v532, 7
        %v534 = vsub.s32 0, %v533
        %v535 = vrot.slane %v530, %v534
        %v553 = vunpack.c.l.b16 %v514
        %v554 = vunpack.c.l.b16 %v515
        %v555 = vunpack.c.l.b16 %v516
        %v556 = vunpack.c.l.b16 %v517
        %v557 = vunpack.c.l.b16 %v518
        %v558 = vunpack.c.l.b16 %v519
        %v559 = vunpack.c.l.b16 %v520
        %v560 = vunpack.c.l.b16 %v521
        %v561 = vunpack.c.l.b16 %v522
        %v562 = vunpack.c.l.b16 %v523
        %v563 = vunpack.c.l.b16 %v524
        %v564 = vunpack.c.l.b16 %v525
        %v565 = vunpack.c.l.b16 %v526
        %v566 = vunpack.c.l.b16 %v527
        %v567 = vunpack.c.l.b16 %v528
        %v568 = vunpack.c.l.b16 %v529
        %v569 = vpack.c.b16 %v554, %v553
        %v570 = vpack.c.b16 %v556, %v555
        %v571 = vpack.c.b16 %v558, %v557
        %v572 = vpack.c.b16 %v560, %v559
        %v573 = vpack.c.b16 %v562, %v561
        %v574 = vpack.c.b16 %v564, %v563
        %v575 = vpack.c.b16 %v566, %v565
        %v576 = vpack.c.b16 %v568, %v567
        %585 = vmatprep.subr.bf16.mxu0 0
        %586 = vmatpush1.bf16.msra.mxu0 %v576
        %587 = vmatprep.subr.bf16.mxu0 0
        %588 = vmatpush1.bf16.msra.mxu0 %v575
        %589 = vmatprep.subr.bf16.mxu0 0
        %590 = vmatpush1.bf16.msra.mxu0 %v574
        %591 = vmatprep.subr.bf16.mxu0 0
        %592 = vmatpush1.bf16.msra.mxu0 %v573
        %593 = vmatprep.subr.bf16.mxu0 0
        %594 = vmatpush1.bf16.msra.mxu0 %v572
        %595 = vmatprep.subr.bf16.mxu0 0
        %596 = vmatpush1.bf16.msra.mxu0 %v571
        %597 = vmatprep.subr.bf16.mxu0 0
        %598 = vmatpush1.bf16.msra.mxu0 %v570
        %599 = vmatprep.subr.bf16.mxu0 0
        %600 = vmatpush1.bf16.msra.mxu0 %v569
        %601 = vmatprep.subr.bf16.mxu0 0
        %602 = vmatpush2.bf16.msra.mxu0 0
        %603 = vmatprep.subr.bf16.mxu0 0
        %604 = vmatpush2.bf16.msra.mxu0 0
        %605 = vmatprep.subr.bf16.mxu0 0
        %606 = vmatpush2.bf16.msra.mxu0 0
        %607 = vmatprep.subr.bf16.mxu0 0
        %608 = vmatpush2.bf16.msra.mxu0 0
        %609 = vmatprep.subr.bf16.mxu0 0
        %610 = vmatpush2.bf16.msra.mxu0 0
        %611 = vmatprep.subr.bf16.mxu0 0
        %612 = vmatpush2.bf16.msra.mxu0 0
        %613 = vmatprep.subr.bf16.mxu0 0
        %614 = vmatpush2.bf16.msra.mxu0 0
        %615 = vmatprep.subr.bf16.mxu0 0
        %616 = vmatpush2.bf16.msra.mxu0 0
        %617 = vmatprep.mubr.bf16.mxu0 0
        %618 = vmatmul.mubr.bf16.gmra.mxu0 %v513
        %v619 = vpop.f32.mrf.mxu0
        %v620 = vadd.f32 %v535, %v619
        %v621 = vpop.f32.mrf.mxu0
        %v622 = vpop.f32.mrf.mxu0
        %v623 = vpop.f32.mrf.mxu0
        %624 = vdwg.mxu0
        %625 = vst [vmem:[%s337] sm:$0xff] %v620
        %s626 = sand.u32 %s186, 1
        %s627 = scalar_lea.sflag [#allocation4], %s626
        %s628 = sand.u32 %s186, 1
        %s629 = smul.addr %s628, 8
        %s630 = scalar_lea.vmem [#allocation10], %s629
        // Predicated region
        $region65: #{tpu_custom_call.1} parent=47 // pred_check
          %p631 = pneg %p196
        $region66: #{tpu_custom_call.1} parent=47 // pred_check_branch
          %633 = sbr.rel (%p631) target = $region68
        $region67: #{tpu_custom_call.1} parent=47 // pred_region
          %s635 = ssub.s32 128, 128
          %636 = vsyncadd %s627, %s635
          %s637 = smul.addr %s26, 128
          %s638 = scalar_lea.hbm %s7, %s637
          %s640 = sshll.u32 %s630, 4
          %s641 = int_to_ptr.vmem [resolvable:$true] %s640
          %643 = dma.vmem_to_hbm [thread:$0]  %s641, 128, %s638, %s627
        $region68: #{tpu_custom_call.1} parent=47 // pred_fallthru
          _
      $region48: #{tpu_custom_call.1} parent=5 // pred_fallthru
        _
      %p644 = scmp.le.s32.totalorder 2, %s21
      // Predicated region
      $region69: #{tpu_custom_call.1} parent=5 // pred_check
        %p645 = pneg %p644
      $region70: #{tpu_custom_call.1} parent=5 // pred_check_branch
        %647 = sbr.rel (%p645) target = $region72
      $region71: #{tpu_custom_call.1} parent=5 // pred_region
        %s648 = ssub.s32 %s21, 2
        // Predicated region
        $region73: #{tpu_custom_call.1} parent=71 // pred_check
          %p649 = pneg %p202
        $region74: #{tpu_custom_call.1} parent=71 // pred_check_branch
          %651 = sbr.rel (%p649) target = $region76
        $region75: #{tpu_custom_call.1} parent=71 // pred_region
          %s652 = sand.u32 %s187, 1
          %s653 = scalar_lea.sflag [#allocation4], %s652
          %s654 = sand.u32 %s187, 1
          %s655 = smul.addr %s654, 8
          %s656 = scalar_lea.vmem [#allocation10], %s655
          %657 = dma.done %s653, 128
        $region76: #{tpu_custom_call.1} parent=71 // pred_fallthru
          _
      $region72: #{tpu_custom_call.1} parent=5 // pred_fallthru
        _
    $region6: #{tpu_custom_call.1} parent=1 // loop_footer
      %s25 = sadd.s32 1, %s21
    $region7: #{tpu_custom_call.1} parent=1 // loop_footer_branch
      %20 = sbr.rel target = $region3
    $region8: #{tpu_custom_call.1} parent=1 // loop_exit
      _
    %658 = vsyncpa [#allocation3], 1
    %s659 = scalar_lea.sflag [#allocation3], 1
    %660 = vsyncpa %s659, 1
    %661 = vsyncpa [#allocation6], 1
    %662 = vsyncpa [#allocation9], 1
    %663 = vsyncpa [#allocation4], 1
    %s664 = scalar_lea.sflag [#allocation4], 1
    %665 = vsyncpa %s664, 1

// kernel: tpu_custom_call.1
$region0: #{tpu_custom_call.1}
  #allocation0 [shape = 'u32[]', space=smem, size = 0x4, offset = 0x4, fixed_abs, tag = 'smem constant byte address 0x4 - core index']
  #allocation1 [shape = 'u32[144,128]{1,0:T(1,128)}', space=vmem, size = 0x12000, scoped, tag = 'internal scratch']
  %s0 = inlined_call_operand.hbm [shape: bf16[16,16], index: 0, kind: input, shape index: {}]
  %s1 = inlined_call_operand.hbm [shape: bf16[16,128], index: 1, kind: input, shape index: {}]
  %s2 = inlined_call_operand.vmem [shape: f32[1,128], index: 2, kind: input, shape index: {}]
  %s3 = inlined_call_operand.hbm [shape: bf16[128,128], index: 3, kind: input, shape index: {}]
  %s4 = inlined_call_operand.vmem [shape: f32[1,128], index: 4, kind: input, shape index: {}]
  %s5 = inlined_call_operand.hbm [shape: bf16[128,128], index: 5, kind: input, shape index: {}]
  %s6 = inlined_call_operand.vmem [shape: f32[1,128], index: 6, kind: input, shape index: {}]
  %s7 = inlined_call_operand.hbm [shape: f32[16,128], index: 7, kind: output, shape index: {}]
  %s8 = sld [smem:[#allocation0]]
  $region77: #{tpu_custom_call.1} parent=0
    _
  %s10 = ssub.s32 1, %s8
  %s11 = scalar_select 0, %s10, %s8
  $region1: #{tpu_custom_call.1} parent=0
    #allocation2 [shape = 'u8[4096]{0}', space=vmem, size = 0x1000, scoped, tag = 'input window, operand 0']
    #allocation3 [shape = 's32[2]{0}', space=sflag, size = 0x8, scoped, tag = 'scoped memory for tpu_custom_call.1']
    #allocation4 [shape = 's32[2]{0}', space=sflag, size = 0x8, scoped, tag = 'scoped memory for tpu_custom_call.1']
    #allocation5 [shape = 'u8[4096]{0}', space=vmem, size = 0x1000, scoped, tag = 'input window, operand 1, single buffered']
    #allocation6 [shape = 's32[1]{0}', space=sflag, size = 0x4, scoped, tag = 'scoped memory for tpu_custom_call.1']
    #allocation7 [shape = 'u8[32768]{0}', space=vmem, size = 0x8000, scoped, tag = 'input window, operand 3, single buffered']
    #allocation8 [shape = 'u8[32768]{0}', space=vmem, size = 0x8000, scoped, tag = 'input window, operand 5, single buffered']
    #allocation9 [shape = 's32[1]{0}', space=sflag, size = 0x4, scoped, tag = 'scoped memory for tpu_custom_call.1']
    #allocation10 [shape = 'u8[8192]{0}', space=vmem, size = 0x2000, scoped, tag = 'output window, operand 0']
    %12 = vsyncpa [#allocation3], 0
    %s13 = scalar_lea.sflag [#allocation3], 1
    %14 = vsyncpa %s13, 0
    %15 = vsyncpa [#allocation6], 0
    %16 = vsyncpa [#allocation9], 0
    %17 = vsyncpa [#allocation4], 0
    %s18 = scalar_lea.sflag [#allocation4], 1
    %19 = vsyncpa %s18, 0
    loop: start=0, step=1, limit=4
    $region2: #{tpu_custom_call.1} parent=1 // loop_pre_header
      _
    $region3: #{tpu_custom_call.1} parent=1 // loop_header
      %s21 = sphi 0, %s25
      %p22 = scmp.ge.s32.totalorder %s21, 4
      %s31 = sphi 0, %s33
      %s34 = sphi 0, %s31
      %s35 = sphi 0, %s34
      %s51 = sphi 0, %s35
      %s55 = sphi 0, %s55
      %s57 = sphi 0, %s55
      %s58 = sphi 0, %s57
      %s72 = sphi 0, %s58
      %s76 = sphi 0, %s76
      %s78 = sphi 0, %s76
      %s79 = sphi 0, %s78
      %s93 = sphi 0, %s79
      %s97 = sphi 0, %s97
      %s99 = sphi 0, %s97
      %s100 = sphi 0, %s99
      %s114 = sphi 0, %s100
      %s118 = sphi 0, %s118
      %s120 = sphi 0, %s118
      %s121 = sphi 0, %s120
      %s135 = sphi 0, %s121
      %s139 = sphi 0, %s139
      %s141 = sphi 0, %s139
      %s142 = sphi 0, %s141
      %s156 = sphi 0, %s142
      %s160 = sphi 0, %s160
      %s162 = sphi 0, %s160
      %s163 = sphi 0, %s162
      %s177 = sphi 0, %s163
      %s183 = sphi 0, %s185
      %s186 = sphi 0, %s183
      %s187 = sphi 0, %s186
      %s203 = sphi 0, %s187
    $region4: #{tpu_custom_call.1} parent=1 // loop_header_branch
      %24 = sbr.rel (%p22) target = $region8
    $region5: #{tpu_custom_call.1} parent=1 // loop_body
      %s26 = ssub.s32 %s21, 1
      %s27 = ssub.s32 %s21, 2
      %s28 = sadd.s32 %s21, 1
      %s29 = ssub.s32 %s21, %s28
      %p30 = scmp.eq.s32.totalorder %s29, 0
      %s32 = sadd.s32 %s31, 1
      %s33 = scalar_select %p30, %s31, %s32
      %p36 = pneg %p30
      %p37 = scmp.eq.s32.totalorder %s21, 1
      %p38 = por %p36, %p37
      %p39 = scmp.ne.s32.totalorder %s31, %s34
      %p40 = scmp.eq.s32.totalorder %s21, 0
      %p41 = por %p39, %p40
      %p42 = scmp.ne.s32.totalorder %s31, %s34
      %p43 = scmp.eq.s32.totalorder %s26, 1
      %p44 = por %p42, %p43
      %p45 = scmp.ne.s32.totalorder %s34, %s35
      %p46 = scmp.eq.s32.totalorder %s26, 0
      %p47 = por %p45, %p46
      %p48 = scmp.ne.s32.totalorder %s34, %s35
      %p49 = scmp.eq.s32.totalorder %s27, 1
      %p50 = por %p48, %p49
      %p52 = scmp.ne.s32.totalorder %s35, %s51
      %p53 = scmp.eq.s32.totalorder %s27, 0
      %p54 = por %p52, %p53
      %s56 = sadd.s32 %s55, 1
      %p59 = scmp.eq.s32.totalorder %s21, 1
      %p60 = scmp.ne.s32.totalorder %s55, %s57
      %p61 = scmp.eq.s32.totalorder %s21, 0
      %p62 = por %p60, %p61
      %p63 = scmp.ne.s32.totalorder %s55, %s57
      %p64 = scmp.eq.s32.totalorder %s26, 1
      %p65 = por %p63, %p64
      %p66 = scmp.ne.s32.totalorder %s57, %s58
      %p67 = scmp.eq.s32.totalorder %s26, 0
      %p68 = por %p66, %p67
      %p69 = scmp.ne.s32.totalorder %s57, %s58
      %p70 = scmp.eq.s32.totalorder %s27, 1
      %p71 = por %p69, %p70
      %p73 = scmp.ne.s32.totalorder %s58, %s72
      %p74 = scmp.eq.s32.totalorder %s27, 0
      %p75 = por %p73, %p74
      %s77 = sadd.s32 %s76, 1
      %p80 = scmp.eq.s32.totalorder %s21, 1
      %p81 = scmp.ne.s32.totalorder %s76, %s78
      %p82 = scmp.eq.s32.totalorder %s21, 0
      %p83 = por %p81, %p82
      %p84 = scmp.ne.s32.totalorder %s76, %s78
      %p85 = scmp.eq.s32.totalorder %s26, 1
      %p86 = por %p84, %p85
      %p87 = scmp.ne.s32.totalorder %s78, %s79
      %p88 = scmp.eq.s32.totalorder %s26, 0
      %p89 = por %p87, %p88
      %p90 = scmp.ne.s32.totalorder %s78, %s79
      %p91 = scmp.eq.s32.totalorder %s27, 1
      %p92 = por %p90, %p91
      %p94 = scmp.ne.s32.totalorder %s79, %s93
      %p95 = scmp.eq.s32.totalorder %s27, 0
      %p96 = por %p94, %p95
      %s98 = sadd.s32 %s97, 1
      %p101 = scmp.eq.s32.totalorder %s21, 1
      %p102 = scmp.ne.s32.totalorder %s97, %s99
      %p103 = scmp.eq.s32.totalorder %s21, 0
      %p104 = por %p102, %p103
      %p105 = scmp.ne.s32.totalorder %s97, %s99
      %p106 = scmp.eq.s32.totalorder %s26, 1
      %p107 = por %p105, %p106
      %p108 = scmp.ne.s32.totalorder %s99, %s100
      %p109 = scmp.eq.s32.totalorder %s26, 0
      %p110 = por %p108, %p109
      %p111 = scmp.ne.s32.totalorder %s99, %s100
      %p112 = scmp.eq.s32.totalorder %s27, 1
      %p113 = por %p111, %p112
      %p115 = scmp.ne.s32.totalorder %s100, %s114
      %p116 = scmp.eq.s32.totalorder %s27, 0
      %p117 = por %p115, %p116
      %s119 = sadd.s32 %s118, 1
      %p122 = scmp.eq.s32.totalorder %s21, 1
      %p123 = scmp.ne.s32.totalorder %s118, %s120
      %p124 = scmp.eq.s32.totalorder %s21, 0
      %p125 = por %p123, %p124
      %p126 = scmp.ne.s32.totalorder %s118, %s120
      %p127 = scmp.eq.s32.totalorder %s26, 1
      %p128 = por %p126, %p127
      %p129 = scmp.ne.s32.totalorder %s120, %s121
      %p130 = scmp.eq.s32.totalorder %s26, 0
      %p131 = por %p129, %p130
      %p132 = scmp.ne.s32.totalorder %s120, %s121
      %p133 = scmp.eq.s32.totalorder %s27, 1
      %p134 = por %p132, %p133
      %p136 = scmp.ne.s32.totalorder %s121, %s135
      %p137 = scmp.eq.s32.totalorder %s27, 0
      %p138 = por %p136, %p137
      %s140 = sadd.s32 %s139, 1
      %p143 = scmp.eq.s32.totalorder %s21, 1
      %p144 = scmp.ne.s32.totalorder %s139, %s141
      %p145 = scmp.eq.s32.totalorder %s21, 0
      %p146 = por %p144, %p145
      %p147 = scmp.ne.s32.totalorder %s139, %s141
      %p148 = scmp.eq.s32.totalorder %s26, 1
      %p149 = por %p147, %p148
      %p150 = scmp.ne.s32.totalorder %s141, %s142
      %p151 = scmp.eq.s32.totalorder %s26, 0
      %p152 = por %p150, %p151
      %p153 = scmp.ne.s32.totalorder %s141, %s142
      %p154 = scmp.eq.s32.totalorder %s27, 1
      %p155 = por %p153, %p154
      %p157 = scmp.ne.s32.totalorder %s142, %s156
      %p158 = scmp.eq.s32.totalorder %s27, 0
      %p159 = por %p157, %p158
      %s161 = sadd.s32 %s160, 1
      %p164 = scmp.eq.s32.totalorder %s21, 1
      %p165 = scmp.ne.s32.totalorder %s160, %s162
      %p166 = scmp.eq.s32.totalorder %s21, 0
      %p167 = por %p165, %p166
      %p168 = scmp.ne.s32.totalorder %s160, %s162
      %p169 = scmp.eq.s32.totalorder %s26, 1
      %p170 = por %p168, %p169
      %p171 = scmp.ne.s32.totalorder %s162, %s163
      %p172 = scmp.eq.s32.totalorder %s26, 0
      %p173 = por %p171, %p172
      %p174 = scmp.ne.s32.totalorder %s162, %s163
      %p175 = scmp.eq.s32.totalorder %s27, 1
      %p176 = por %p174, %p175
      %p178 = scmp.ne.s32.totalorder %s163, %s177
      %p179 = scmp.eq.s32.totalorder %s27, 0
      %p180 = por %p178, %p179
      %s181 = ssub.s32 %s21, %s28
      %p182 = scmp.eq.s32.totalorder %s181, 0
      %s184 = sadd.s32 %s183, 1
      %s185 = scalar_select %p182, %s183, %s184
      %p188 = pneg %p182
      %p189 = scmp.eq.s32.totalorder %s21, 1
      %p190 = por %p188, %p189
      %p191 = scmp.ne.s32.totalorder %s183, %s186
      %p192 = scmp.eq.s32.totalorder %s21, 0
      %p193 = por %p191, %p192
      %p194 = scmp.ne.s32.totalorder %s183, %s186
      %p195 = scmp.eq.s32.totalorder %s26, 1
      %p196 = por %p194, %p195
      %p197 = scmp.ne.s32.totalorder %s186, %s187
      %p198 = scmp.eq.s32.totalorder %s26, 0
      %p199 = por %p197, %p198
      %p200 = scmp.ne.s32.totalorder %s186, %s187
      %p201 = scmp.eq.s32.totalorder %s27, 1
      %p202 = por %p200, %p201
      %p204 = scmp.ne.s32.totalorder %s187, %s203
      %p205 = scmp.eq.s32.totalorder %s27, 0
      %p206 = por %p204, %p205
      %p207 = scmp.le.s32.totalorder 1, %s21
      %p208 = scmp.lt.s32.totalorder %s21, 3
      %p209 = pnand %p207, %p208
      %p210 = pneg %p209
      // Predicated region
      $region9: #{tpu_custom_call.1} parent=5 // pred_check
        _
      $region10: #{tpu_custom_call.1} parent=5 // pred_check_branch
        %212 = sbr.rel (%p209) target = $region12
      $region11: #{tpu_custom_call.1} parent=5 // pred_region
        %s213 = ssub.s32 %s21, 1
        // Predicated region
        $region13: #{tpu_custom_call.1} parent=11 // pred_check
          %p214 = pneg %p68
        $region14: #{tpu_custom_call.1} parent=11 // pred_check_branch
          %216 = sbr.rel (%p214) target = $region16
        $region15: #{tpu_custom_call.1} parent=11 // pred_region
          %s218 = ssub.s32 128, 128
          %219 = vsyncadd [#allocation6], %s218
          %s220 = sshll.u32 [#allocation5], 4
          %s221 = int_to_ptr.vmem [resolvable:$true] %s220
          %226 = dma.hbm_to_vmem [thread:$0]  %s1, 128, %s221, [#allocation6], 64, 64, 4
        $region16: #{tpu_custom_call.1} parent=11 // pred_fallthru
          _
        // Predicated region
        $region17: #{tpu_custom_call.1} parent=11 // pred_check
          %p227 = pneg %p89
        $region18: #{tpu_custom_call.1} parent=11 // pred_check_branch
          %229 = sbr.rel (%p227) target = $region20
        $region19: #{tpu_custom_call.1} parent=11 // pred_region
          _
        $region20: #{tpu_custom_call.1} parent=11 // pred_fallthru
          _
        // Predicated region
        $region21: #{tpu_custom_call.1} parent=11 // pred_check
          %p230 = pneg %p110
        $region22: #{tpu_custom_call.1} parent=11 // pred_check_branch
          %232 = sbr.rel (%p230) target = $region24
        $region23: #{tpu_custom_call.1} parent=11 // pred_region
          %s234 = ssub.s32 1024, 1024
          %235 = vsyncadd [#allocation6], %s234
          %s236 = sshll.u32 [#allocation7], 4
          %s237 = int_to_ptr.vmem [resolvable:$true] %s236
          %242 = dma.hbm_to_vmem [thread:$0]  %s3, 1024, %s237, [#allocation6], 64, 64, 4
        $region24: #{tpu_custom_call.1} parent=11 // pred_fallthru
          _
        // Predicated region
        $region25: #{tpu_custom_call.1} parent=11 // pred_check
          %p243 = pneg %p131
        $region26: #{tpu_custom_call.1} parent=11 // pred_check_branch
          %245 = sbr.rel (%p243) target = $region28
        $region27: #{tpu_custom_call.1} parent=11 // pred_region
          _
        $region28: #{tpu_custom_call.1} parent=11 // pred_fallthru
          _
        // Predicated region
        $region29: #{tpu_custom_call.1} parent=11 // pred_check
          %p246 = pneg %p152
        $region30: #{tpu_custom_call.1} parent=11 // pred_check_branch
          %248 = sbr.rel (%p246) target = $region32
        $region31: #{tpu_custom_call.1} parent=11 // pred_region
          %s250 = ssub.s32 1024, 1024
          %251 = vsyncadd [#allocation9], %s250
          %s252 = sshll.u32 [#allocation8], 4
          %s253 = int_to_ptr.vmem [resolvable:$true] %s252
          %258 = dma.hbm_to_vmem [thread:$0]  %s5, 1024, %s253, [#allocation9], 64, 64, 4
        $region32: #{tpu_custom_call.1} parent=11 // pred_fallthru
          _
        // Predicated region
        $region33: #{tpu_custom_call.1} parent=11 // pred_check
          %p259 = pneg %p173
        $region34: #{tpu_custom_call.1} parent=11 // pred_check_branch
          %261 = sbr.rel (%p259) target = $region36
        $region35: #{tpu_custom_call.1} parent=11 // pred_region
          _
        $region36: #{tpu_custom_call.1} parent=11 // pred_fallthru
          _
      $region12: #{tpu_custom_call.1} parent=5 // pred_fallthru
        _
      %p262 = scmp.lt.s32.totalorder %s21, 2
      // Predicated region
      $region37: #{tpu_custom_call.1} parent=5 // pred_check
        %p263 = pneg %p262
      $region38: #{tpu_custom_call.1} parent=5 // pred_check_branch
        %265 = sbr.rel (%p263) target = $region40
      $region39: #{tpu_custom_call.1} parent=5 // pred_region
        // Predicated region
        $region41: #{tpu_custom_call.1} parent=39 // pred_check
          %p266 = pneg %p41
        $region42: #{tpu_custom_call.1} parent=39 // pred_check_branch
          %268 = sbr.rel (%p266) target = $region44
        $region43: #{tpu_custom_call.1} parent=39 // pred_region
          %s269 = sand.u32 %s31, 1
          %s270 = scalar_lea.sflag [#allocation3], %s269
          %s271 = sand.u32 %s31, 1
          %s272 = smul.addr %s271, 4
          %s273 = scalar_lea.vmem [#allocation2], %s272
          %s275 = ssub.s32 64, 64
          %276 = vsyncadd %s270, %s275
          %s277 = smul.addr %s21, 64
          %s278 = scalar_lea.hbm %s0, %s277
          %s280 = sshll.u32 %s273, 4
          %s281 = int_to_ptr.vmem [resolvable:$true] %s280
          %283 = dma.hbm_to_vmem [thread:$0]  %s278, 64, %s281, %s270
        $region44: #{tpu_custom_call.1} parent=39 // pred_fallthru
          _
      $region40: #{tpu_custom_call.1} parent=5 // pred_fallthru
        _
      %p284 = scmp.le.s32.totalorder 1, %s21
      %p285 = scmp.lt.s32.totalorder %s21, 3
      %p286 = pnand %p284, %p285
      %p287 = pneg %p286
      // Predicated region
      $region45: #{tpu_custom_call.1} parent=5 // pred_check
        _
      $region46: #{tpu_custom_call.1} parent=5 // pred_check_branch
        %289 = sbr.rel (%p286) target = $region48
      $region47: #{tpu_custom_call.1} parent=5 // pred_region
        %s290 = ssub.s32 %s21, 1
        %s291 = sand.u32 %s34, 1
        %s292 = scalar_lea.sflag [#allocation3], %s291
        %s293 = sand.u32 %s34, 1
        %s294 = smul.addr %s293, 4
        %s295 = scalar_lea.vmem [#allocation2], %s294
        // Predicated region
        $region49: #{tpu_custom_call.1} parent=47 // pred_check
          %p296 = pneg %p47
        $region50: #{tpu_custom_call.1} parent=47 // pred_check_branch
          %298 = sbr.rel (%p296) target = $region52
        $region51: #{tpu_custom_call.1} parent=47 // pred_region
          %299 = dma.done %s292, 64
        $region52: #{tpu_custom_call.1} parent=47 // pred_fallthru
          _
        // Predicated region
        $region53: #{tpu_custom_call.1} parent=47 // pred_check
          %p300 = pneg %p68
        $region54: #{tpu_custom_call.1} parent=47 // pred_check_branch
          %302 = sbr.rel (%p300) target = $region56
        $region55: #{tpu_custom_call.1} parent=47 // pred_region
          %303 = dma.done [#allocation6], 128
        $region56: #{tpu_custom_call.1} parent=47 // pred_fallthru
          _
        // Predicated region
        $region57: #{tpu_custom_call.1} parent=47 // pred_check
          %p304 = pneg %p110
        $region58: #{tpu_custom_call.1} parent=47 // pred_check_branch
          %306 = sbr.rel (%p304) target = $region60
        $region59: #{tpu_custom_call.1} parent=47 // pred_region
          %307 = dma.done [#allocation6], 1024
        $region60: #{tpu_custom_call.1} parent=47 // pred_fallthru
          _
        // Predicated region
        $region61: #{tpu_custom_call.1} parent=47 // pred_check
          %p308 = pneg %p152
        $region62: #{tpu_custom_call.1} parent=47 // pred_check_branch
          %310 = sbr.rel (%p308) target = $region64
        $region63: #{tpu_custom_call.1} parent=47 // pred_region
          %311 = dma.done [#allocation9], 1024
        $region64: #{tpu_custom_call.1} parent=47 // pred_fallthru
          _
        %s312 = sand.u32 %s34, 1
        %s313 = scalar_lea.sflag [#allocation3], %s312
        %s314 = sand.u32 %s34, 1
        %s315 = smul.addr %s314, 4
        %s316 = scalar_lea.vmem [#allocation2], %s315
        %p317 = pneg %p47
        %p318 = pneg %p44
        %p319 = pneg %p68
        %p320 = pneg %p65
        %p321 = pneg %p89
        %p322 = pneg %p86
        %p323 = pneg %p110
        %p324 = pneg %p107
        %p325 = pneg %p131
        %p326 = pneg %p128
        %p327 = pneg %p152
        %p328 = pneg %p149
        %p329 = pneg %p173
        %p330 = pneg %p170
        %p331 = pneg %p199
        %p332 = pneg %p196
        %s333 = sand.u32 %s186, 1
        %s334 = scalar_lea.sflag [#allocation4], %s333
        %s335 = sand.u32 %s186, 1
        %s336 = smul.addr %s335, 8
        %s337 = scalar_lea.vmem [#allocation10], %s336
        %v339 = vld [vmem:[%s295] sm:$0xf]
        %v340 = vld [vmem:[#allocation5] sm:$0xf]
        %v341 = vld [vmem:[#allocation5 + $0x4] sm:$0xf]
        %v342 = vld [vmem:[%s2] sm:$0x1]
        %v344 = vlaneseq
        %v345 = vshrl.u32 %v344, 7
        %v346 = vsub.s32 0, %v345
        %v347 = vrot.slane %v342, %v346
        %v351 = vunpack.c.l.b16 %v340
        %v352 = vunpack.c.l.b16 %v341
        %v353 = vpack.c.b16 %v352, %v351
        %vm355 = vcmask 130048
        %v357 = vsel %vm355, %v339, 0
        %359 = vmatprep.subr.bf16.mxu0 0
        %360 = vmatpush1.bf16.msra.mxu0 0
        %361 = vmatprep.subr.bf16.mxu0 0
        %362 = vmatpush1.bf16.msra.mxu0 0
        %363 = vmatprep.subr.bf16.mxu0 0
        %364 = vmatpush1.bf16.msra.mxu0 0
        %365 = vmatprep.subr.bf16.mxu0 0
        %366 = vmatpush1.bf16.msra.mxu0 0
        %367 = vmatprep.subr.bf16.mxu0 0
        %368 = vmatpush1.bf16.msra.mxu0 0
        %369 = vmatprep.subr.bf16.mxu0 0
        %370 = vmatpush1.bf16.msra.mxu0 0
        %371 = vmatprep.subr.bf16.mxu0 0
        %372 = vmatpush1.bf16.msra.mxu0 0
        %373 = vmatprep.subr.bf16.mxu0 0
        %374 = vmatpush1.bf16.msra.mxu0 %v353
        %375 = vmatprep.subr.bf16.mxu0 0
        %376 = vmatpush2.bf16.msra.mxu0 0
        %377 = vmatprep.subr.bf16.mxu0 0
        %378 = vmatpush2.bf16.msra.mxu0 0
        %379 = vmatprep.subr.bf16.mxu0 0
        %380 = vmatpush2.bf16.msra.mxu0 0
        %381 = vmatprep.subr.bf16.mxu0 0
        %382 = vmatpush2.bf16.msra.mxu0 0
        %383 = vmatprep.subr.bf16.mxu0 0
        %384 = vmatpush2.bf16.msra.mxu0 0
        %385 = vmatprep.subr.bf16.mxu0 0
        %386 = vmatpush2.bf16.msra.mxu0 0
        %387 = vmatprep.subr.bf16.mxu0 0
        %388 = vmatpush2.bf16.msra.mxu0 0
        %389 = vmatprep.subr.bf16.mxu0 0
        %390 = vmatpush2.bf16.msra.mxu0 0
        %391 = vmatprep.mubr.bf16.mxu0 0
        %392 = vmatmul.mubr.bf16.gmra.mxu0 %v357
        %v393 = vpop.f32.mrf.mxu0
        %v394 = vadd.f32 %v347, %v393
        %v395 = vpop.f32.mrf.mxu0
        %v396 = vpop.f32.mrf.mxu0
        %v397 = vpop.f32.mrf.mxu0
        %398 = vdwg.mxu0
        %v399 = vmax.f32 %v394, 0.0
        %v400 = vpack.c.bf16 %v399, %v399
        %v401 = vld [vmem:[#allocation7] sm:$0xf]
        %v402 = vld [vmem:[#allocation7 + $0x4] sm:$0xf]
        %v403 = vld [vmem:[#allocation7 + $0x8] sm:$0xf]
        %v404 = vld [vmem:[#allocation7 + $0xc] sm:$0xf]
        %v405 = vld [vmem:[#allocation7 + $0x10] sm:$0xf]
        %v406 = vld [vmem:[#allocation7 + $0x14] sm:$0xf]
        %v407 = vld [vmem:[#allocation7 + $0x18] sm:$0xf]
        %v408 = vld [vmem:[#allocation7 + $0x1c] sm:$0xf]
        %v409 = vld [vmem:[#allocation7 + $0x20] sm:$0xf]
        %v410 = vld [vmem:[#allocation7 + $0x24] sm:$0xf]
        %v411 = vld [vmem:[#allocation7 + $0x28] sm:$0xf]
        %v412 = vld [vmem:[#allocation7 + $0x2c] sm:$0xf]
        %v413 = vld [vmem:[#allocation7 + $0x30] sm:$0xf]
        %v414 = vld [vmem:[#allocation7 + $0x34] sm:$0xf]
        %v415 = vld [vmem:[#allocation7 + $0x38] sm:$0xf]
        %v416 = vld [vmem:[#allocation7 + $0x3c] sm:$0xf]
        %v417 = vld [vmem:[%s4] sm:$0x1]
        %v419 = vlaneseq
        %v420 = vshrl.u32 %v419, 7
        %v421 = vsub.s32 0, %v420
        %v422 = vrot.slane %v417, %v421
        %v440 = vunpack.c.l.b16 %v401
        %v441 = vunpack.c.l.b16 %v402
        %v442 = vunpack.c.l.b16 %v403
        %v443 = vunpack.c.l.b16 %v404
        %v444 = vunpack.c.l.b16 %v405
        %v445 = vunpack.c.l.b16 %v406
        %v446 = vunpack.c.l.b16 %v407
        %v447 = vunpack.c.l.b16 %v408
        %v448 = vunpack.c.l.b16 %v409
        %v449 = vunpack.c.l.b16 %v410
        %v450 = vunpack.c.l.b16 %v411
        %v451 = vunpack.c.l.b16 %v412
        %v452 = vunpack.c.l.b16 %v413
        %v453 = vunpack.c.l.b16 %v414
        %v454 = vunpack.c.l.b16 %v415
        %v455 = vunpack.c.l.b16 %v416
        %v456 = vpack.c.b16 %v441, %v440
        %v457 = vpack.c.b16 %v443, %v442
        %v458 = vpack.c.b16 %v445, %v444
        %v459 = vpack.c.b16 %v447, %v446
        %v460 = vpack.c.b16 %v449, %v448
        %v461 = vpack.c.b16 %v451, %v450
        %v462 = vpack.c.b16 %v453, %v452
        %v463 = vpack.c.b16 %v455, %v454
        %472 = vmatprep.subr.bf16.mxu0 0
        %473 = vmatpush1.bf16.msra.mxu0 %v463
        %474 = vmatprep.subr.bf16.mxu0 0
        %475 = vmatpush1.bf16.msra.mxu0 %v462
        %476 = vmatprep.subr.bf16.mxu0 0
        %477 = vmatpush1.bf16.msra.mxu0 %v461
        %478 = vmatprep.subr.bf16.mxu0 0
        %479 = vmatpush1.bf16.msra.mxu0 %v460
        %480 = vmatprep.subr.bf16.mxu0 0
        %481 = vmatpush1.bf16.msra.mxu0 %v459
        %482 = vmatprep.subr.bf16.mxu0 0
        %483 = vmatpush1.bf16.msra.mxu0 %v458
        %484 = vmatprep.subr.bf16.mxu0 0
        %485 = vmatpush1.bf16.msra.mxu0 %v457
        %486 = vmatprep.subr.bf16.mxu0 0
        %487 = vmatpush1.bf16.msra.mxu0 %v456
        %488 = vmatprep.subr.bf16.mxu0 0
        %489 = vmatpush2.bf16.msra.mxu0 0
        %490 = vmatprep.subr.bf16.mxu0 0
        %491 = vmatpush2.bf16.msra.mxu0 0
        %492 = vmatprep.subr.bf16.mxu0 0
        %493 = vmatpush2.bf16.msra.mxu0 0
        %494 = vmatprep.subr.bf16.mxu0 0
        %495 = vmatpush2.bf16.msra.mxu0 0
        %496 = vmatprep.subr.bf16.mxu0 0
        %497 = vmatpush2.bf16.msra.mxu0 0
        %498 = vmatprep.subr.bf16.mxu0 0
        %499 = vmatpush2.bf16.msra.mxu0 0
        %500 = vmatprep.subr.bf16.mxu0 0
        %501 = vmatpush2.bf16.msra.mxu0 0
        %502 = vmatprep.subr.bf16.mxu0 0
        %503 = vmatpush2.bf16.msra.mxu0 0
        %504 = vmatprep.mubr.bf16.mxu0 0
        %505 = vmatmul.mubr.bf16.gmra.mxu0 %v400
        %v506 = vpop.f32.mrf.mxu0
        %v507 = vadd.f32 %v422, %v506
        %v508 = vpop.f32.mrf.mxu0
        %v509 = vpop.f32.mrf.mxu0
        %v510 = vpop.f32.mrf.mxu0
        %511 = vdwg.mxu0
        %v512 = vmax.f32 %v507, 0.0
        %v513 = vpack.c.bf16 %v512, %v512
        %v514 = vld [vmem:[#allocation8] sm:$0xf]
        %v515 = vld [vmem:[#allocation8 + $0x4] sm:$0xf]
        %v516 = vld [vmem:[#allocation8 + $0x8] sm:$0xf]
        %v517 = vld [vmem:[#allocation8 + $0xc] sm:$0xf]
        %v518 = vld [vmem:[#allocation8 + $0x10] sm:$0xf]
        %v519 = vld [vmem:[#allocation8 + $0x14] sm:$0xf]
        %v520 = vld [vmem:[#allocation8 + $0x18] sm:$0xf]
        %v521 = vld [vmem:[#allocation8 + $0x1c] sm:$0xf]
        %v522 = vld [vmem:[#allocation8 + $0x20] sm:$0xf]
        %v523 = vld [vmem:[#allocation8 + $0x24] sm:$0xf]
        %v524 = vld [vmem:[#allocation8 + $0x28] sm:$0xf]
        %v525 = vld [vmem:[#allocation8 + $0x2c] sm:$0xf]
        %v526 = vld [vmem:[#allocation8 + $0x30] sm:$0xf]
        %v527 = vld [vmem:[#allocation8 + $0x34] sm:$0xf]
        %v528 = vld [vmem:[#allocation8 + $0x38] sm:$0xf]
        %v529 = vld [vmem:[#allocation8 + $0x3c] sm:$0xf]
        %v530 = vld [vmem:[%s6] sm:$0x1]
        %v532 = vlaneseq
        %v533 = vshrl.u32 %v532, 7
        %v534 = vsub.s32 0, %v533
        %v535 = vrot.slane %v530, %v534
        %v553 = vunpack.c.l.b16 %v514
        %v554 = vunpack.c.l.b16 %v515
        %v555 = vunpack.c.l.b16 %v516
        %v556 = vunpack.c.l.b16 %v517
        %v557 = vunpack.c.l.b16 %v518
        %v558 = vunpack.c.l.b16 %v519
        %v559 = vunpack.c.l.b16 %v520
        %v560 = vunpack.c.l.b16 %v521
        %v561 = vunpack.c.l.b16 %v522
        %v562 = vunpack.c.l.b16 %v523
        %v563 = vunpack.c.l.b16 %v524
        %v564 = vunpack.c.l.b16 %v525
        %v565 = vunpack.c.l.b16 %v526
        %v566 = vunpack.c.l.b16 %v527
        %v567 = vunpack.c.l.b16 %v528
        %v568 = vunpack.c.l.b16 %v529
        %v569 = vpack.c.b16 %v554, %v553
        %v570 = vpack.c.b16 %v556, %v555
        %v571 = vpack.c.b16 %v558, %v557
        %v572 = vpack.c.b16 %v560, %v559
        %v573 = vpack.c.b16 %v562, %v561
        %v574 = vpack.c.b16 %v564, %v563
        %v575 = vpack.c.b16 %v566, %v565
        %v576 = vpack.c.b16 %v568, %v567
        %585 = vmatprep.subr.bf16.mxu0 0
        %586 = vmatpush1.bf16.msra.mxu0 %v576
        %587 = vmatprep.subr.bf16.mxu0 0
        %588 = vmatpush1.bf16.msra.mxu0 %v575
        %589 = vmatprep.subr.bf16.mxu0 0
        %590 = vmatpush1.bf16.msra.mxu0 %v574
        %591 = vmatprep.subr.bf16.mxu0 0
        %592 = vmatpush1.bf16.msra.mxu0 %v573
        %593 = vmatprep.subr.bf16.mxu0 0
        %594 = vmatpush1.bf16.msra.mxu0 %v572
        %595 = vmatprep.subr.bf16.mxu0 0
        %596 = vmatpush1.bf16.msra.mxu0 %v571
        %597 = vmatprep.subr.bf16.mxu0 0
        %598 = vmatpush1.bf16.msra.mxu0 %v570
        %599 = vmatprep.subr.bf16.mxu0 0
        %600 = vmatpush1.bf16.msra.mxu0 %v569
        %601 = vmatprep.subr.bf16.mxu0 0
        %602 = vmatpush2.bf16.msra.mxu0 0
        %603 = vmatprep.subr.bf16.mxu0 0
        %604 = vmatpush2.bf16.msra.mxu0 0
        %605 = vmatprep.subr.bf16.mxu0 0
        %606 = vmatpush2.bf16.msra.mxu0 0
        %607 = vmatprep.subr.bf16.mxu0 0
        %608 = vmatpush2.bf16.msra.mxu0 0
        %609 = vmatprep.subr.bf16.mxu0 0
        %610 = vmatpush2.bf16.msra.mxu0 0
        %611 = vmatprep.subr.bf16.mxu0 0
        %612 = vmatpush2.bf16.msra.mxu0 0
        %613 = vmatprep.subr.bf16.mxu0 0
        %614 = vmatpush2.bf16.msra.mxu0 0
        %615 = vmatprep.subr.bf16.mxu0 0
        %616 = vmatpush2.bf16.msra.mxu0 0
        %617 = vmatprep.mubr.bf16.mxu0 0
        %618 = vmatmul.mubr.bf16.gmra.mxu0 %v513
        %v619 = vpop.f32.mrf.mxu0
        %v620 = vadd.f32 %v535, %v619
        %v621 = vpop.f32.mrf.mxu0
        %v622 = vpop.f32.mrf.mxu0
        %v623 = vpop.f32.mrf.mxu0
        %624 = vdwg.mxu0
        %625 = vst [vmem:[%s337] sm:$0xff] %v620
        %s626 = sand.u32 %s186, 1
        %s627 = scalar_lea.sflag [#allocation4], %s626
        %s628 = sand.u32 %s186, 1
        %s629 = smul.addr %s628, 8
        %s630 = scalar_lea.vmem [#allocation10], %s629
        // Predicated region
        $region65: #{tpu_custom_call.1} parent=47 // pred_check
          %p631 = pneg %p196
        $region66: #{tpu_custom_call.1} parent=47 // pred_check_branch
          %633 = sbr.rel (%p631) target = $region68
        $region67: #{tpu_custom_call.1} parent=47 // pred_region
          %s635 = ssub.s32 128, 128
          %636 = vsyncadd %s627, %s635
          %s637 = smul.addr %s26, 128
          %s638 = scalar_lea.hbm %s7, %s637
          %s640 = sshll.u32 %s630, 4
          %s641 = int_to_ptr.vmem [resolvable:$true] %s640
          %643 = dma.vmem_to_hbm [thread:$0]  %s641, 128, %s638, %s627
        $region68: #{tpu_custom_call.1} parent=47 // pred_fallthru
          _
      $region48: #{tpu_custom_call.1} parent=5 // pred_fallthru
        _
      %p644 = scmp.le.s32.totalorder 2, %s21
      // Predicated region
      $region69: #{tpu_custom_call.1} parent=5 // pred_check
        %p645 = pneg %p644
      $region70: #{tpu_custom_call.1} parent=5 // pred_check_branch
        %647 = sbr.rel (%p645) target = $region72
      $region71: #{tpu_custom_call.1} parent=5 // pred_region
        %s648 = ssub.s32 %s21, 2
        // Predicated region
        $region73: #{tpu_custom_call.1} parent=71 // pred_check
          %p649 = pneg %p202
        $region74: #{tpu_custom_call.1} parent=71 // pred_check_branch
          %651 = sbr.rel (%p649) target = $region76
        $region75: #{tpu_custom_call.1} parent=71 // pred_region
          %s652 = sand.u32 %s187, 1
          %s653 = scalar_lea.sflag [#allocation4], %s652
          %s654 = sand.u32 %s187, 1
          %s655 = smul.addr %s654, 8
          %s656 = scalar_lea.vmem [#allocation10], %s655
          %657 = dma.done %s653, 128
        $region76: #{tpu_custom_call.1} parent=71 // pred_fallthru
          _
      $region72: #{tpu_custom_call.1} parent=5 // pred_fallthru
        _
    $region6: #{tpu_custom_call.1} parent=1 // loop_footer
      %s25 = sadd.s32 1, %s21
    $region7: #{tpu_custom_call.1} parent=1 // loop_footer_branch
      %20 = sbr.rel target = $region3
    $region8: #{tpu_custom_call.1} parent=1 // loop_exit
      _
    %658 = vsyncpa [#allocation3], 1
    %s659 = scalar_lea.sflag [#allocation3], 1
    %660 = vsyncpa %s659, 1
    %661 = vsyncpa [#allocation6], 1
    %662 = vsyncpa [#allocation9], 1
    %663 = vsyncpa [#allocation4], 1
    %s664 = scalar_lea.sflag [#allocation4], 1
    %665 = vsyncpa %s664, 1

</llo_original>
